<compile_context>
chip_gen: v7x
topology: tpu7x:2x2x1
jax: 0.10.0
libtpu: 0.0.40
codegen_flags: <defaults>
</compile_context>

<pallas_src>
import functools

import jax
import jax.numpy as jnp
from jax.experimental import pallas as pl
from jax.experimental.pallas import tpu as pltpu

# Logical model dims (PyTorch spec).
IN_DIM = 28 * 28   # 784  (multiple of 16 -> fine as bf16 matmul K dim, no padding)
H1 = 300
H2 = 100
OUT_DIM = 10

# 128-lane-aligned padded output dims of each matmul (weights only; x is NOT padded).
H1_P = 384
H2_P = 128
OUT_P = 128

_NEG_BIG = -1.0e30  # bias for padded class columns -> softmax prob exactly 0


def _mlp_softmax_kernel(x_ref, w1_ref, b1_ref, w2_ref, b2_ref, w3_ref, b3_ref,
                        o_ref):
    """Whole MLP hot path (3 matmuls, 2 relus, softmax) for one batch tile.

    x arrives at its HBM dtype (f32 or bf16) and logical 784 width; the bf16 cast for
    the MXU is done in-register.  Accumulation, bias-add, ReLU and softmax are f32
    (v5e VPU/EUP have no bf16 path); only the final store is bf16.
    """
    x = x_ref[...].astype(jnp.bfloat16)                               # (TB, 784)

    h1 = jnp.dot(x, w1_ref[...], preferred_element_type=jnp.float32)
    h1 = jnp.maximum(h1 + b1_ref[...], 0.0).astype(jnp.bfloat16)      # (TB, 384)

    h2 = jnp.dot(h1, w2_ref[...], preferred_element_type=jnp.float32)
    h2 = jnp.maximum(h2 + b2_ref[...], 0.0).astype(jnp.bfloat16)      # (TB, 128)

    logits = jnp.dot(h2, w3_ref[...], preferred_element_type=jnp.float32)
    logits = logits + b3_ref[...]                                     # (TB, 128), pad cols ~ -1e30

    # Numerically stable softmax over the (padded) class axis, all in f32; padded
    # columns contribute exp(-1e30 - m) == 0, so the real 10 classes are untouched.
    m = jnp.max(logits, axis=-1, keepdims=True)
    e = jnp.exp(logits - m)
    denom = jnp.sum(e, axis=-1, keepdims=True)
    o_ref[...] = (e * pl.reciprocal(denom, approx=True)).astype(o_ref.dtype)


def prepare_params(w1, b1, w2, b2, w3, b3):
    """Pad params on their output (N) dims to 128-aligned widths, bf16 weights.

    Expects (in, out)-layout weights (PyTorch nn.Linear weights must be transposed
    when importing) and (1, out) biases at logical sizes.  The fc1 K dim (784) is
    NOT padded.  Padded class columns of b3 get a large negative bias so their
    softmax probability is exactly 0.  Biases stay f32.
    """
    def pad_to(a, rows, cols):
        a = a.astype(jnp.float32)
        return jnp.pad(a, ((0, rows - a.shape[0]), (0, cols - a.shape[1])))

    w1p = pad_to(w1, IN_DIM, H1_P).astype(jnp.bfloat16)   # (784, 384)
    b1p = pad_to(b1, 1, H1_P)                             # (1, 384) f32
    w2p = pad_to(w2, H1_P, H2_P).astype(jnp.bfloat16)     # (384, 128)
    b2p = pad_to(b2, 1, H2_P)                             # (1, 128) f32
    w3p = pad_to(w3, H2_P, OUT_P).astype(jnp.bfloat16)    # (128, 128)
    b3p = jnp.concatenate(
        [b3.astype(jnp.float32),
         jnp.full((1, OUT_P - OUT_DIM), _NEG_BIG, jnp.float32)], axis=1)
    return w1p, b1p, w2p, b2p, w3p, b3p


def _round_up(n, m):
    return ((n + m - 1) // m) * m


@functools.partial(jax.jit, static_argnames=("block_b",))
def simple_feedforward(x, w1p, b1p, w2p, b2p, w3p, b3p, *, block_b=1024):
    """x: (B, C, H, W) or (B, 784), f32 (or pre-converted bf16 for minimal HBM read).

    Params from prepare_params().  Returns (B, 10) f32 softmax probabilities.
    """
    B = x.shape[0]
    x2d = x.reshape(B, -1)               # flatten; no dtype/pad pass over x
    assert x2d.shape[1] == IN_DIM

    # Adaptive batch tile: multiple of 16 (bf16-safe sublane packing), never
    # over-padding small batches, and >=2 grid steps whenever B > 16 so the
    # "parallel" batch axis can shard across both v7x TensorCores.
    bb = min(block_b, _round_up(B, 16))
    bb = min(bb, max(16, _round_up(-(-B // 2), 16)))
    bb = max(16, _round_up(bb, 16))
    assert bb % 16 == 0

    grid_b = pl.cdiv(B, bb)
    B_pad = grid_b * bb
    if B_pad != B:
        x2d = jnp.pad(x2d, ((0, B_pad - B), (0, 0)))   # batch pad only, same dtype

    # Batch is tiled; weights/biases are small (<1 MiB total) and use constant
    # index_maps, so they stay resident in VMEM across all grid steps.
    in_specs = [
        pl.BlockSpec((bb, IN_DIM), lambda i: (i, 0)),      # full 784 width == array dim
        pl.BlockSpec((IN_DIM, H1_P), lambda i: (0, 0)),
        pl.BlockSpec((1, H1_P), lambda i: (0, 0)),
        pl.BlockSpec((H1_P, H2_P), lambda i: (0, 0)),
        pl.BlockSpec((1, H2_P), lambda i: (0, 0)),
        pl.BlockSpec((H2_P, OUT_P), lambda i: (0, 0)),
        pl.BlockSpec((1, OUT_P), lambda i: (0, 0)),
    ]
    out_specs = pl.BlockSpec((bb, OUT_P), lambda i: (i, 0))   # lane-dense, bf16

    probs_pad = pl.pallas_call(
        _mlp_softmax_kernel,
        out_shape=jax.ShapeDtypeStruct((B_pad, OUT_P), jnp.bfloat16),
        grid_spec=pltpu.PrefetchScalarGridSpec(
            num_scalar_prefetch=0,
            grid=(grid_b,),
            in_specs=in_specs,
            out_specs=out_specs,
        ),
        compiler_params=pltpu.CompilerParams(
            dimension_semantics=("parallel",),
            vmem_limit_bytes=32 * 1024 * 1024,
        ),
    )(x2d, w1p, b1p, w2p, b2p, w3p, b3p)

    # Drop batch padding and the 118 padded (zero-probability) classes; the slice is
    # tiny (B x 10) so the f32 upcast for the public interface is negligible.
    return probs_pad[:B, :OUT_DIM].astype(jnp.float32)


def init_params(key):
    """Deterministic synthetic init mimicking nn.Linear default U(-1/sqrt(in), 1/sqrt(in)).

    Weights are returned already transposed to (in, out) layout, f32, logical sizes.
    """
    ks = jax.random.split(key, 6)

    def linear(kw, kb, fan_in, fan_out):
        bound = 1.0 / jnp.sqrt(float(fan_in))
        w = jax.random.uniform(kw, (fan_in, fan_out), jnp.float32, -bound, bound)
        b = jax.random.uniform(kb, (1, fan_out), jnp.float32, -bound, bound)
        return w, b

    w1, b1 = linear(ks[0], ks[1], IN_DIM, H1)
    w2, b2 = linear(ks[2], ks[3], H1, H2)
    w3, b3 = linear(ks[4], ks[5], H2, OUT_DIM)
    return w1, b1, w2, b2, w3, b3


def _reference(x, w1, b1, w2, b2, w3, b3):
    x2d = x.reshape(x.shape[0], -1).astype(jnp.float32)
    h1 = jax.nn.relu(x2d @ w1 + b1)
    h2 = jax.nn.relu(h1 @ w2 + b2)
    logits = h2 @ w3 + b3
    return jax.nn.softmax(logits, axis=1)


# TODO(synk): correlate_nodes / correlate_layer is a host-side numpy weight-rescaling
# utility (not part of forward); it is not translated to a Pallas kernel.


if __name__ == "__main__":
    key = jax.random.PRNGKey(0)
    k_param, k_x = jax.random.split(key)

    w1, b1, w2, b2, w3, b3 = init_params(k_param)
    padded_params = prepare_params(w1, b1, w2, b2, w3, b3)

    # MNIST-like input: (batch, channels=1, 28, 28)
    B = 8
    x = jax.random.normal(k_x, (B, 1, 28, 28), dtype=jnp.float32)

    probs = simple_feedforward(x, *padded_params)
    probs = jax.block_until_ready(probs)

    ref = _reference(x, w1, b1, w2, b2, w3, b3)
    assert probs.shape == (B, OUT_DIM)
    # bf16 weights/activations/output (f32 accumulation) vs f32 reference.
    assert jnp.allclose(probs, ref, atol=2e-2, rtol=0.0), "mismatch vs reference"
    assert jnp.allclose(jnp.sum(probs, axis=1), 1.0, atol=1e-2), "softmax rows must sum to 1"

    print("KERNEL_OK")
</pallas_src>

<mosaic_0001>
module attributes {stable_mosaic.version = 11 : i64} {
  func.func @_mlp_softmax_kernel(%arg0: i32, %arg1: memref<16x784xf32, #tpu.memory_space<vmem>>, %arg2: memref<784x384xbf16, #tpu.memory_space<vmem>>, %arg3: memref<1x384xf32, #tpu.memory_space<vmem>>, %arg4: memref<384x128xbf16, #tpu.memory_space<vmem>>, %arg5: memref<1x128xf32, #tpu.memory_space<vmem>>, %arg6: memref<128x128xbf16, #tpu.memory_space<vmem>>, %arg7: memref<1x128xf32, #tpu.memory_space<vmem>>, %arg8: memref<16x128xbf16, #tpu.memory_space<vmem>>) attributes {dimension_semantics = [#tpu.dimension_semantics<parallel>], iteration_bounds = array<i64: 1>, scalar_prefetch = 0 : i64, scratch_operands = 0 : i64, tpu.core_type = #tpu.core_type<tc>, window_params = [{transform_indices = @transform_0, window_bounds = array<i64: 16, 784>}, {pipeline_mode = #tpu.pipeline_mode<synchronous>, transform_indices = @transform_1, window_bounds = array<i64: 784, 384>}, {pipeline_mode = #tpu.pipeline_mode<synchronous>, transform_indices = @transform_2, window_bounds = array<i64: 1, 384>}, {pipeline_mode = #tpu.pipeline_mode<synchronous>, transform_indices = @transform_3, window_bounds = array<i64: 384, 128>}, {pipeline_mode = #tpu.pipeline_mode<synchronous>, transform_indices = @transform_4, window_bounds = array<i64: 1, 128>}, {pipeline_mode = #tpu.pipeline_mode<synchronous>, transform_indices = @transform_5, window_bounds = array<i64: 128, 128>}, {pipeline_mode = #tpu.pipeline_mode<synchronous>, transform_indices = @transform_6, window_bounds = array<i64: 1, 128>}, {transform_indices = @transform_7, window_bounds = array<i64: 16, 128>}]} {
    %c0 = arith.constant 0 : index
    %c0_0 = arith.constant 0 : index
    %0 = vector.load %arg1[%c0, %c0_0] : memref<16x784xf32, #tpu.memory_space<vmem>>, vector<16x784xf32>
    %1 = arith.truncf %0 : vector<16x784xf32> to vector<16x784xbf16>
    %c0_1 = arith.constant 0 : index
    %c0_2 = arith.constant 0 : index
    %2 = vector.load %arg2[%c0_1, %c0_2] : memref<784x384xbf16, #tpu.memory_space<vmem>>, vector<784x384xbf16>
    %cst = arith.constant dense<0.000000e+00> : vector<16x384xf32>
    %3 = tpu.matmul %1, %2, %cst {dimension_numbers = #tpu.dot_dimension_numbers<[1], [0], [0], [1], [0, 0, 1, 1], [], []>} : vector<16x784xbf16>, vector<784x384xbf16>, vector<16x384xf32> -> vector<16x384xf32>
    %c0_3 = arith.constant 0 : index
    %c0_4 = arith.constant 0 : index
    %4 = vector.load %arg3[%c0_3, %c0_4] : memref<1x384xf32, #tpu.memory_space<vmem>>, vector<1x384xf32>
    %5 = vector.broadcast %4 : vector<1x384xf32> to vector<16x384xf32>
    %6 = arith.addf %3, %5 : vector<16x384xf32>
    %cst_5 = arith.constant 0.000000e+00 : f32
    %7 = vector.broadcast %cst_5 : f32 to vector<16x384xf32>
    %8 = arith.maximumf %6, %7 : vector<16x384xf32>
    %9 = arith.truncf %8 : vector<16x384xf32> to vector<16x384xbf16>
    %c0_6 = arith.constant 0 : index
    %c0_7 = arith.constant 0 : index
    %10 = vector.load %arg4[%c0_6, %c0_7] : memref<384x128xbf16, #tpu.memory_space<vmem>>, vector<384x128xbf16>
    %cst_8 = arith.constant dense<0.000000e+00> : vector<16x128xf32>
    %11 = tpu.matmul %9, %10, %cst_8 {dimension_numbers = #tpu.dot_dimension_numbers<[1], [0], [0], [1], [0, 0, 1, 1], [], []>} : vector<16x384xbf16>, vector<384x128xbf16>, vector<16x128xf32> -> vector<16x128xf32>
    %c0_9 = arith.constant 0 : index
    %c0_10 = arith.constant 0 : index
    %12 = vector.load %arg5[%c0_9, %c0_10] : memref<1x128xf32, #tpu.memory_space<vmem>>, vector<1x128xf32>
    %13 = vector.broadcast %12 : vector<1x128xf32> to vector<16x128xf32>
    %14 = arith.addf %11, %13 : vector<16x128xf32>
    %cst_11 = arith.constant 0.000000e+00 : f32
    %15 = vector.broadcast %cst_11 : f32 to vector<16x128xf32>
    %16 = arith.maximumf %14, %15 : vector<16x128xf32>
    %17 = arith.truncf %16 : vector<16x128xf32> to vector<16x128xbf16>
    %c0_12 = arith.constant 0 : index
    %c0_13 = arith.constant 0 : index
    %18 = vector.load %arg6[%c0_12, %c0_13] : memref<128x128xbf16, #tpu.memory_space<vmem>>, vector<128x128xbf16>
    %cst_14 = arith.constant dense<0.000000e+00> : vector<16x128xf32>
    %19 = tpu.matmul %17, %18, %cst_14 {dimension_numbers = #tpu.dot_dimension_numbers<[1], [0], [0], [1], [0, 0, 1, 1], [], []>} : vector<16x128xbf16>, vector<128x128xbf16>, vector<16x128xf32> -> vector<16x128xf32>
    %c0_15 = arith.constant 0 : index
    %c0_16 = arith.constant 0 : index
    %20 = vector.load %arg7[%c0_15, %c0_16] : memref<1x128xf32, #tpu.memory_space<vmem>>, vector<1x128xf32>
    %21 = vector.broadcast %20 : vector<1x128xf32> to vector<16x128xf32>
    %22 = arith.addf %19, %21 : vector<16x128xf32>
    %cst_17 = arith.constant dense<0xFF800000> : vector<16xf32>
    %23 = vector.multi_reduction <maximumf>, %22, %cst_17 [1] : vector<16x128xf32> to vector<16xf32>
    %24 = vector.shape_cast %23 : vector<16xf32> to vector<16x1xf32>
    %25 = vector.broadcast %24 : vector<16x1xf32> to vector<16x128xf32>
    %26 = arith.subf %22, %25 : vector<16x128xf32>
    %27 = math.exp %26 : vector<16x128xf32>
    %cst_18 = arith.constant dense<0.000000e+00> : vector<16xf32>
    %28 = vector.multi_reduction <add>, %27, %cst_18 [1] : vector<16x128xf32> to vector<16xf32>
    %29 = vector.shape_cast %28 : vector<16xf32> to vector<16x1xf32>
    %30 = tpu.reciprocal %29 {approx = true} : vector<16x1xf32> -> vector<16x1xf32>
    %31 = vector.broadcast %30 : vector<16x1xf32> to vector<16x128xf32>
    %32 = arith.mulf %27, %31 : vector<16x128xf32>
    %33 = arith.truncf %32 : vector<16x128xf32> to vector<16x128xbf16>
    %c0_19 = arith.constant 0 : index
    %c0_20 = arith.constant 0 : index
    %34 = vector.load %arg8[%c0_19, %c0_20] : memref<16x128xbf16, #tpu.memory_space<vmem>>, vector<16x128xbf16>
    tpu.vector_store %arg8[%c0_19, %c0_20], %33 {strides = array<i32>} : memref<16x128xbf16, #tpu.memory_space<vmem>>, vector<16x128xbf16>,
    return
  }
  func.func @transform_0(%arg0: i32) -> (i32, i32) {
    %c0_i32 = arith.constant 0 : i32
    %c0_i32_0 = arith.constant 0 : i32
    return %arg0, %c0_i32 : i32, i32
  }
  func.func @transform_1(%arg0: i32) -> (i32, i32) {
    %c0_i32 = arith.constant 0 : i32
    %c0_i32_0 = arith.constant 0 : i32
    %c0_i32_1 = arith.constant 0 : i32
    return %c0_i32, %c0_i32_0 : i32, i32
  }
  func.func @transform_2(%arg0: i32) -> (i32, i32) {
    %c0_i32 = arith.constant 0 : i32
    %c0_i32_0 = arith.constant 0 : i32
    %c0_i32_1 = arith.constant 0 : i32
    return %c0_i32, %c0_i32_0 : i32, i32
  }
  func.func @transform_3(%arg0: i32) -> (i32, i32) {
    %c0_i32 = arith.constant 0 : i32
    %c0_i32_0 = arith.constant 0 : i32
    %c0_i32_1 = arith.constant 0 : i32
    return %c0_i32, %c0_i32_0 : i32, i32
  }
  func.func @transform_4(%arg0: i32) -> (i32, i32) {
    %c0_i32 = arith.constant 0 : i32
    %c0_i32_0 = arith.constant 0 : i32
    %c0_i32_1 = arith.constant 0 : i32
    return %c0_i32, %c0_i32_0 : i32, i32
  }
  func.func @transform_5(%arg0: i32) -> (i32, i32) {
    %c0_i32 = arith.constant 0 : i32
    %c0_i32_0 = arith.constant 0 : i32
    %c0_i32_1 = arith.constant 0 : i32
    return %c0_i32, %c0_i32_0 : i32, i32
  }
  func.func @transform_6(%arg0: i32) -> (i32, i32) {
    %c0_i32 = arith.constant 0 : i32
    %c0_i32_0 = arith.constant 0 : i32
    %c0_i32_1 = arith.constant 0 : i32
    return %c0_i32, %c0_i32_0 : i32, i32
  }
  func.func @transform_7(%arg0: i32) -> (i32, i32) {
    %c0_i32 = arith.constant 0 : i32
    %c0_i32_0 = arith.constant 0 : i32
    return %arg0, %c0_i32 : i32, i32
  }
}

</mosaic_0001>

<llo_original>
// kernel: simple_feedforward.1
$region0: #{simple_feedforward.1}
  #allocation0 [shape = 'u32[]', space=smem, size = 0x4, offset = 0x4, fixed_abs, tag = 'smem constant byte address 0x4 - core index']
  #allocation1 [shape = 'u32[144,128]{1,0:T(1,128)}', space=vmem, size = 0x12000, scoped, tag = 'internal scratch']
  %s0 = inlined_call_operand.vmem [shape: f32[16,784], index: 0, kind: input, shape index: {}]
  %s1 = inlined_call_operand.hbm [shape: bf16[784,384], index: 1, kind: input, shape index: {}]
  %s2 = inlined_call_operand.vmem [shape: f32[1,384], index: 2, kind: input, shape index: {}]
  %s3 = inlined_call_operand.vmem [shape: bf16[384,128], index: 3, kind: input, shape index: {}]
  %s4 = inlined_call_operand.vmem [shape: f32[1,128], index: 4, kind: input, shape index: {}]
  %s5 = inlined_call_operand.vmem [shape: bf16[128,128], index: 5, kind: input, shape index: {}]
  %s6 = inlined_call_operand.vmem [shape: f32[1,128], index: 6, kind: input, shape index: {}]
  %s7 = inlined_call_operand.vmem [shape: bf16[16,128], index: 7, kind: output, shape index: {}]
  %s8 = sld [smem:[#allocation0]]
  $region42: #{simple_feedforward.1} parent=0
    _
  %s10 = ssub.s32 1, %s8
  %s11 = scalar_select 0, %s10, %s8
  $region1: #{simple_feedforward.1} parent=0
    #allocation2 [shape = 'u8[602112]{0}', space=vmem, size = 0x93000, scoped, tag = 'input window, operand 1, single buffered']
    #allocation3 [shape = 's32[1]{0}', space=sflag, size = 0x4, scoped, tag = 'scoped memory for simple_feedforward.1']
    %12 = vsyncpa [#allocation3], 0
    // Predicated region
    $region2: #{simple_feedforward.1} parent=1 // pred_check
      _
    $region3: #{simple_feedforward.1} parent=1 // pred_check_branch
      %14 = sbr.rel (0) target = $region5
    $region4: #{simple_feedforward.1} parent=1 // pred_region
      _
    $region5: #{simple_feedforward.1} parent=1 // pred_fallthru
      _
    // Predicated region
    $region6: #{simple_feedforward.1} parent=1 // pred_check
      _
    $region7: #{simple_feedforward.1} parent=1 // pred_check_branch
      %16 = sbr.rel (0) target = $region9
    $region8: #{simple_feedforward.1} parent=1 // pred_region
      %s18 = ssub.s32 18816, 18816
      %19 = vsyncadd [#allocation3], %s18
      %s20 = sshll.u32 [#allocation2], 4
      %s21 = int_to_ptr.vmem [resolvable:$true] %s20
      %26 = dma.hbm_to_vmem [thread:$0]  %s1, 18816, %s21, [#allocation3], 192, 192, 12
    $region9: #{simple_feedforward.1} parent=1 // pred_fallthru
      _
    // Predicated region
    $region10: #{simple_feedforward.1} parent=1 // pred_check
      _
    $region11: #{simple_feedforward.1} parent=1 // pred_check_branch
      %28 = sbr.rel (0) target = $region13
    $region12: #{simple_feedforward.1} parent=1 // pred_region
      _
    $region13: #{simple_feedforward.1} parent=1 // pred_fallthru
      _
    // Predicated region
    $region14: #{simple_feedforward.1} parent=1 // pred_check
      _
    $region15: #{simple_feedforward.1} parent=1 // pred_check_branch
      %30 = sbr.rel (0) target = $region17
    $region16: #{simple_feedforward.1} parent=1 // pred_region
      _
    $region17: #{simple_feedforward.1} parent=1 // pred_fallthru
      _
    // Predicated region
    $region18: #{simple_feedforward.1} parent=1 // pred_check
      _
    $region19: #{simple_feedforward.1} parent=1 // pred_check_branch
      %32 = sbr.rel (0) target = $region21
    $region20: #{simple_feedforward.1} parent=1 // pred_region
      _
    $region21: #{simple_feedforward.1} parent=1 // pred_fallthru
      _
    // Predicated region
    $region22: #{simple_feedforward.1} parent=1 // pred_check
      _
    $region23: #{simple_feedforward.1} parent=1 // pred_check_branch
      %34 = sbr.rel (0) target = $region25
    $region24: #{simple_feedforward.1} parent=1 // pred_region
      _
    $region25: #{simple_feedforward.1} parent=1 // pred_fallthru
      _
    // Predicated region
    $region26: #{simple_feedforward.1} parent=1 // pred_check
      _
    $region27: #{simple_feedforward.1} parent=1 // pred_check_branch
      %36 = sbr.rel (0) target = $region29
    $region28: #{simple_feedforward.1} parent=1 // pred_region
      _
    $region29: #{simple_feedforward.1} parent=1 // pred_fallthru
      _
    // Predicated region
    $region30: #{simple_feedforward.1} parent=1 // pred_check
      _
    $region31: #{simple_feedforward.1} parent=1 // pred_check_branch
      %38 = sbr.rel (0) target = $region33
    $region32: #{simple_feedforward.1} parent=1 // pred_region
      %39 = dma.done [#allocation3], 18816
    $region33: #{simple_feedforward.1} parent=1 // pred_fallthru
      _
    %v41 = vld [vmem:[%s0] sm:$0xff]
    %v42 = vld [vmem:[%s0 + $0x8] sm:$0xff]
    %v43 = vld [vmem:[%s0 + $0x10] sm:$0xff]
    %v44 = vld [vmem:[%s0 + $0x18] sm:$0xff]
    %v45 = vld [vmem:[%s0 + $0x20] sm:$0xff]
    %v46 = vld [vmem:[%s0 + $0x28] sm:$0xff]
    %v47 = vld [vmem:[%s0 + $0x30] sm:$0xff]
    %v48 = vld [vmem:[%s0 + $0x38] sm:$0xff]
    %v49 = vld [vmem:[%s0 + $0x40] sm:$0xff]
    %v50 = vld [vmem:[%s0 + $0x48] sm:$0xff]
    %v51 = vld [vmem:[%s0 + $0x50] sm:$0xff]
    %v52 = vld [vmem:[%s0 + $0x58] sm:$0xff]
    %v53 = vld [vmem:[%s0 + $0x60] sm:$0xff]
    %v54 = vld [vmem:[%s0 + $0x68] sm:$0xff]
    %v55 = vpack.c.bf16 %v48, %v41
    %v56 = vpack.c.bf16 %v49, %v42
    %v57 = vpack.c.bf16 %v50, %v43
    %v58 = vpack.c.bf16 %v51, %v44
    %v59 = vpack.c.bf16 %v52, %v45
    %v60 = vpack.c.bf16 %v53, %v46
    %v61 = vpack.c.bf16 %v54, %v47
    %v62 = vld [vmem:[#allocation2] sm:$0xff]
    %v63 = vld [vmem:[#allocation2 + $0x8] sm:$0xf]
    %v64 = vld [vmem:[#allocation2 + $0xc] sm:$0xff]
    %v65 = vld [vmem:[#allocation2 + $0x14] sm:$0xf]
    %v66 = vld [vmem:[#allocation2 + $0x18] sm:$0xff]
    %v67 = vld [vmem:[#allocation2 + $0x20] sm:$0xf]
    %v68 = vld [vmem:[#allocation2 + $0x24] sm:$0xff]
    %v69 = vld [vmem:[#allocation2 + $0x2c] sm:$0xf]
    %v70 = vld [vmem:[#allocation2 + $0x30] sm:$0xff]
    %v71 = vld [vmem:[#allocation2 + $0x38] sm:$0xf]
    %v72 = vld [vmem:[#allocation2 + $0x3c] sm:$0xff]
    %v73 = vld [vmem:[#allocation2 + $0x44] sm:$0xf]
    %v74 = vld [vmem:[#allocation2 + $0x48] sm:$0xff]
    %v75 = vld [vmem:[#allocation2 + $0x50] sm:$0xf]
    %v76 = vld [vmem:[#allocation2 + $0x54] sm:$0xff]
    %v77 = vld [vmem:[#allocation2 + $0x5c] sm:$0xf]
    %v78 = vld [vmem:[#allocation2 + $0x60] sm:$0xff]
    %v79 = vld [vmem:[#allocation2 + $0x68] sm:$0xf]
    %v80 = vld [vmem:[#allocation2 + $0x6c] sm:$0xff]
    %v81 = vld [vmem:[#allocation2 + $0x74] sm:$0xf]
    %v82 = vld [vmem:[#allocation2 + $0x78] sm:$0xff]
    %v83 = vld [vmem:[#allocation2 + $0x80] sm:$0xf]
    %v84 = vld [vmem:[#allocation2 + $0x84] sm:$0xff]
    %v85 = vld [vmem:[#allocation2 + $0x8c] sm:$0xf]
    %v86 = vld [vmem:[#allocation2 + $0x90] sm:$0xff]
    %v87 = vld [vmem:[#allocation2 + $0x98] sm:$0xf]
    %v88 = vld [vmem:[#allocation2 + $0x9c] sm:$0xff]
    %v89 = vld [vmem:[#allocation2 + $0xa4] sm:$0xf]
    %v90 = vld [vmem:[#allocation2 + $0xa8] sm:$0xff]
    %v91 = vld [vmem:[#allocation2 + $0xb0] sm:$0xf]
    %v92 = vld [vmem:[#allocation2 + $0xb4] sm:$0xff]
    %v93 = vld [vmem:[#allocation2 + $0xbc] sm:$0xf]
    %v94 = vld [vmem:[#allocation2 + $0xc0] sm:$0xff]
    %v95 = vld [vmem:[#allocation2 + $0xc8] sm:$0xf]
    %v96 = vld [vmem:[#allocation2 + $0xcc] sm:$0xff]
    %v97 = vld [vmem:[#allocation2 + $0xd4] sm:$0xf]
    %v98 = vld [vmem:[#allocation2 + $0xd8] sm:$0xff]
    %v99 = vld [vmem:[#allocation2 + $0xe0] sm:$0xf]
    %v100 = vld [vmem:[#allocation2 + $0xe4] sm:$0xff]
    %v101 = vld [vmem:[#allocation2 + $0xec] sm:$0xf]
    %v102 = vld [vmem:[#allocation2 + $0xf0] sm:$0xff]
    %v103 = vld [vmem:[#allocation2 + $0xf8] sm:$0xf]
    %v104 = vld [vmem:[#allocation2 + $0xfc] sm:$0xff]
    %v105 = vld [vmem:[#allocation2 + $0x104] sm:$0xf]
    %v106 = vld [vmem:[#allocation2 + $0x108] sm:$0xff]
    %v107 = vld [vmem:[#allocation2 + $0x110] sm:$0xf]
    %v108 = vld [vmem:[#allocation2 + $0x114] sm:$0xff]
    %v109 = vld [vmem:[#allocation2 + $0x11c] sm:$0xf]
    %v110 = vld [vmem:[#allocation2 + $0x120] sm:$0xff]
    %v111 = vld [vmem:[#allocation2 + $0x128] sm:$0xf]
    %v112 = vld [vmem:[#allocation2 + $0x12c] sm:$0xff]
    %v113 = vld [vmem:[#allocation2 + $0x134] sm:$0xf]
    %v114 = vld [vmem:[#allocation2 + $0x138] sm:$0xff]
    %v115 = vld [vmem:[#allocation2 + $0x140] sm:$0xf]
    %v116 = vld [vmem:[#allocation2 + $0x144] sm:$0xff]
    %v117 = vld [vmem:[#allocation2 + $0x14c] sm:$0xf]
    %v118 = vld [vmem:[#allocation2 + $0x150] sm:$0xff]
    %v119 = vld [vmem:[#allocation2 + $0x158] sm:$0xf]
    %v120 = vld [vmem:[#allocation2 + $0x15c] sm:$0xff]
    %v121 = vld [vmem:[#allocation2 + $0x164] sm:$0xf]
    %v122 = vld [vmem:[#allocation2 + $0x168] sm:$0xff]
    %v123 = vld [vmem:[#allocation2 + $0x170] sm:$0xf]
    %v124 = vld [vmem:[#allocation2 + $0x174] sm:$0xff]
    %v125 = vld [vmem:[#allocation2 + $0x17c] sm:$0xf]
    %v126 = vld [vmem:[#allocation2 + $0x180] sm:$0xff]
    %v127 = vld [vmem:[#allocation2 + $0x188] sm:$0xf]
    %v128 = vld [vmem:[#allocation2 + $0x18c] sm:$0xff]
    %v129 = vld [vmem:[#allocation2 + $0x194] sm:$0xf]
    %v130 = vld [vmem:[#allocation2 + $0x198] sm:$0xff]
    %v131 = vld [vmem:[#allocation2 + $0x1a0] sm:$0xf]
    %v132 = vld [vmem:[#allocation2 + $0x1a4] sm:$0xff]
    %v133 = vld [vmem:[#allocation2 + $0x1ac] sm:$0xf]
    %v134 = vld [vmem:[#allocation2 + $0x1b0] sm:$0xff]
    %v135 = vld [vmem:[#allocation2 + $0x1b8] sm:$0xf]
    %v136 = vld [vmem:[#allocation2 + $0x1bc] sm:$0xff]
    %v137 = vld [vmem:[#allocation2 + $0x1c4] sm:$0xf]
    %v138 = vld [vmem:[#allocation2 + $0x1c8] sm:$0xff]
    %v139 = vld [vmem:[#allocation2 + $0x1d0] sm:$0xf]
    %v140 = vld [vmem:[#allocation2 + $0x1d4] sm:$0xff]
    %v141 = vld [vmem:[#allocation2 + $0x1dc] sm:$0xf]
    %v142 = vld [vmem:[#allocation2 + $0x1e0] sm:$0xff]
    %v143 = vld [vmem:[#allocation2 + $0x1e8] sm:$0xf]
    %v144 = vld [vmem:[#allocation2 + $0x1ec] sm:$0xff]
    %v145 = vld [vmem:[#allocation2 + $0x1f4] sm:$0xf]
    %v146 = vld [vmem:[#allocation2 + $0x1f8] sm:$0xff]
    %v147 = vld [vmem:[#allocation2 + $0x200] sm:$0xf]
    %v148 = vld [vmem:[#allocation2 + $0x204] sm:$0xff]
    %v149 = vld [vmem:[#allocation2 + $0x20c] sm:$0xf]
    %v150 = vld [vmem:[#allocation2 + $0x210] sm:$0xff]
    %v151 = vld [vmem:[#allocation2 + $0x218] sm:$0xf]
    %v152 = vld [vmem:[#allocation2 + $0x21c] sm:$0xff]
    %v153 = vld [vmem:[#allocation2 + $0x224] sm:$0xf]
    %v154 = vld [vmem:[#allocation2 + $0x228] sm:$0xff]
    %v155 = vld [vmem:[#allocation2 + $0x230] sm:$0xf]
    %v156 = vld [vmem:[#allocation2 + $0x234] sm:$0xff]
    %v157 = vld [vmem:[#allocation2 + $0x23c] sm:$0xf]
    %v158 = vld [vmem:[#allocation2 + $0x240] sm:$0xff]
    %v159 = vld [vmem:[#allocation2 + $0x248] sm:$0xf]
    %v160 = vld [vmem:[#allocation2 + $0x24c] sm:$0xff]
    %v161 = vld [vmem:[#allocation2 + $0x254] sm:$0xf]
    %v162 = vld [vmem:[#allocation2 + $0x258] sm:$0xff]
    %v163 = vld [vmem:[#allocation2 + $0x260] sm:$0xf]
    %v164 = vld [vmem:[#allocation2 + $0x264] sm:$0xff]
    %v165 = vld [vmem:[#allocation2 + $0x26c] sm:$0xf]
    %v166 = vld [vmem:[#allocation2 + $0x270] sm:$0xff]
    %v167 = vld [vmem:[#allocation2 + $0x278] sm:$0xf]
    %v168 = vld [vmem:[#allocation2 + $0x27c] sm:$0xff]
    %v169 = vld [vmem:[#allocation2 + $0x284] sm:$0xf]
    %v170 = vld [vmem:[#allocation2 + $0x288] sm:$0xff]
    %v171 = vld [vmem:[#allocation2 + $0x290] sm:$0xf]
    %v172 = vld [vmem:[#allocation2 + $0x294] sm:$0xff]
    %v173 = vld [vmem:[#allocation2 + $0x29c] sm:$0xf]
    %v174 = vld [vmem:[#allocation2 + $0x2a0] sm:$0xff]
    %v175 = vld [vmem:[#allocation2 + $0x2a8] sm:$0xf]
    %v176 = vld [vmem:[#allocation2 + $0x2ac] sm:$0xff]
    %v177 = vld [vmem:[#allocation2 + $0x2b4] sm:$0xf]
    %v178 = vld [vmem:[#allocation2 + $0x2b8] sm:$0xff]
    %v179 = vld [vmem:[#allocation2 + $0x2c0] sm:$0xf]
    %v180 = vld [vmem:[#allocation2 + $0x2c4] sm:$0xff]
    %v181 = vld [vmem:[#allocation2 + $0x2cc] sm:$0xf]
    %v182 = vld [vmem:[#allocation2 + $0x2d0] sm:$0xff]
    %v183 = vld [vmem:[#allocation2 + $0x2d8] sm:$0xf]
    %v184 = vld [vmem:[#allocation2 + $0x2dc] sm:$0xff]
    %v185 = vld [vmem:[#allocation2 + $0x2e4] sm:$0xf]
    %v186 = vld [vmem:[#allocation2 + $0x2e8] sm:$0xff]
    %v187 = vld [vmem:[#allocation2 + $0x2f0] sm:$0xf]
    %v188 = vld [vmem:[#allocation2 + $0x2f4] sm:$0xff]
    %v189 = vld [vmem:[#allocation2 + $0x2fc] sm:$0xf]
    %v190 = vld [vmem:[#allocation2 + $0x300] sm:$0xff]
    %v191 = vld [vmem:[#allocation2 + $0x308] sm:$0xf]
    %v192 = vld [vmem:[#allocation2 + $0x30c] sm:$0xff]
    %v193 = vld [vmem:[#allocation2 + $0x314] sm:$0xf]
    %v194 = vld [vmem:[#allocation2 + $0x318] sm:$0xff]
    %v195 = vld [vmem:[#allocation2 + $0x320] sm:$0xf]
    %v196 = vld [vmem:[#allocation2 + $0x324] sm:$0xff]
    %v197 = vld [vmem:[#allocation2 + $0x32c] sm:$0xf]
    %v198 = vld [vmem:[#allocation2 + $0x330] sm:$0xff]
    %v199 = vld [vmem:[#allocation2 + $0x338] sm:$0xf]
    %v200 = vld [vmem:[#allocation2 + $0x33c] sm:$0xff]
    %v201 = vld [vmem:[#allocation2 + $0x344] sm:$0xf]
    %v202 = vld [vmem:[#allocation2 + $0x348] sm:$0xff]
    %v203 = vld [vmem:[#allocation2 + $0x350] sm:$0xf]
    %v204 = vld [vmem:[#allocation2 + $0x354] sm:$0xff]
    %v205 = vld [vmem:[#allocation2 + $0x35c] sm:$0xf]
    %v206 = vld [vmem:[#allocation2 + $0x360] sm:$0xff]
    %v207 = vld [vmem:[#allocation2 + $0x368] sm:$0xf]
    %v208 = vld [vmem:[#allocation2 + $0x36c] sm:$0xff]
    %v209 = vld [vmem:[#allocation2 + $0x374] sm:$0xf]
    %v210 = vld [vmem:[#allocation2 + $0x378] sm:$0xff]
    %v211 = vld [vmem:[#allocation2 + $0x380] sm:$0xf]
    %v212 = vld [vmem:[#allocation2 + $0x384] sm:$0xff]
    %v213 = vld [vmem:[#allocation2 + $0x38c] sm:$0xf]
    %v214 = vld [vmem:[#allocation2 + $0x390] sm:$0xff]
    %v215 = vld [vmem:[#allocation2 + $0x398] sm:$0xf]
    %v216 = vld [vmem:[#allocation2 + $0x39c] sm:$0xff]
    %v217 = vld [vmem:[#allocation2 + $0x3a4] sm:$0xf]
    %v218 = vld [vmem:[#allocation2 + $0x3a8] sm:$0xff]
    %v219 = vld [vmem:[#allocation2 + $0x3b0] sm:$0xf]
    %v220 = vld [vmem:[#allocation2 + $0x3b4] sm:$0xff]
    %v221 = vld [vmem:[#allocation2 + $0x3bc] sm:$0xf]
    %v222 = vld [vmem:[#allocation2 + $0x3c0] sm:$0xff]
    %v223 = vld [vmem:[#allocation2 + $0x3c8] sm:$0xf]
    %v224 = vld [vmem:[#allocation2 + $0x3cc] sm:$0xff]
    %v225 = vld [vmem:[#allocation2 + $0x3d4] sm:$0xf]
    %v226 = vld [vmem:[#allocation2 + $0x3d8] sm:$0xff]
    %v227 = vld [vmem:[#allocation2 + $0x3e0] sm:$0xf]
    %v228 = vld [vmem:[#allocation2 + $0x3e4] sm:$0xff]
    %v229 = vld [vmem:[#allocation2 + $0x3ec] sm:$0xf]
    %v230 = vld [vmem:[#allocation2 + $0x3f0] sm:$0xff]
    %v231 = vld [vmem:[#allocation2 + $0x3f8] sm:$0xf]
    %v232 = vld [vmem:[#allocation2 + $0x3fc] sm:$0xff]
    %v233 = vld [vmem:[#allocation2 + $0x404] sm:$0xf]
    %v234 = vld [vmem:[#allocation2 + $0x408] sm:$0xff]
    %v235 = vld [vmem:[#allocation2 + $0x410] sm:$0xf]
    %v236 = vld [vmem:[#allocation2 + $0x414] sm:$0xff]
    %v237 = vld [vmem:[#allocation2 + $0x41c] sm:$0xf]
    %v238 = vld [vmem:[#allocation2 + $0x420] sm:$0xff]
    %v239 = vld [vmem:[#allocation2 + $0x428] sm:$0xf]
    %v240 = vld [vmem:[#allocation2 + $0x42c] sm:$0xff]
    %v241 = vld [vmem:[#allocation2 + $0x434] sm:$0xf]
    %v242 = vld [vmem:[#allocation2 + $0x438] sm:$0xff]
    %v243 = vld [vmem:[#allocation2 + $0x440] sm:$0xf]
    %v244 = vld [vmem:[#allocation2 + $0x444] sm:$0xff]
    %v245 = vld [vmem:[#allocation2 + $0x44c] sm:$0xf]
    %v246 = vld [vmem:[#allocation2 + $0x450] sm:$0xff]
    %v247 = vld [vmem:[#allocation2 + $0x458] sm:$0xf]
    %v248 = vld [vmem:[#allocation2 + $0x45c] sm:$0xff]
    %v249 = vld [vmem:[#allocation2 + $0x464] sm:$0xf]
    %v250 = vld [vmem:[#allocation2 + $0x468] sm:$0xff]
    %v251 = vld [vmem:[#allocation2 + $0x470] sm:$0xf]
    %v252 = vld [vmem:[#allocation2 + $0x474] sm:$0xff]
    %v253 = vld [vmem:[#allocation2 + $0x47c] sm:$0xf]
    %v254 = vld [vmem:[#allocation2 + $0x480] sm:$0xff]
    %v255 = vld [vmem:[#allocation2 + $0x488] sm:$0xf]
    %v256 = vld [vmem:[#allocation2 + $0x48c] sm:$0xff]
    %v257 = vld [vmem:[#allocation2 + $0x494] sm:$0xf]
    %v258 = vld [vmem:[%s2] sm:$0x7]
    %v260 = vlaneseq
    %v261 = vshrl.u32 %v260, 7
    %v262 = vsub.s32 0, %v261
    %v263 = vrot.slane %v258, %v262
    %v264 = vlaneseq
    %v265 = vshrl.u32 %v264, 7
    %v266 = vsub.s32 1, %v265
    %v267 = vrot.slane %v258, %v266
    %v268 = vlaneseq
    %v269 = vshrl.u32 %v268, 7
    %v270 = vsub.s32 2, %v269
    %v271 = vrot.slane %v258, %v270
    %v471 = vunpack.c.l.b16 %v62
    %v472 = vunpack.c.h.b16 %v62
    %v473 = vunpack.c.l.b16 %v63
    %v474 = vunpack.c.l.b16 %v64
    %v475 = vunpack.c.h.b16 %v64
    %v476 = vunpack.c.l.b16 %v65
    %v477 = vunpack.c.l.b16 %v66
    %v478 = vunpack.c.h.b16 %v66
    %v479 = vunpack.c.l.b16 %v67
    %v480 = vunpack.c.l.b16 %v68
    %v481 = vunpack.c.h.b16 %v68
    %v482 = vunpack.c.l.b16 %v69
    %v483 = vunpack.c.l.b16 %v70
    %v484 = vunpack.c.h.b16 %v70
    %v485 = vunpack.c.l.b16 %v71
    %v486 = vunpack.c.l.b16 %v72
    %v487 = vunpack.c.h.b16 %v72
    %v488 = vunpack.c.l.b16 %v73
    %v489 = vunpack.c.l.b16 %v74
    %v490 = vunpack.c.h.b16 %v74
    %v491 = vunpack.c.l.b16 %v75
    %v492 = vunpack.c.l.b16 %v76
    %v493 = vunpack.c.h.b16 %v76
    %v494 = vunpack.c.l.b16 %v77
    %v495 = vunpack.c.l.b16 %v78
    %v496 = vunpack.c.h.b16 %v78
    %v497 = vunpack.c.l.b16 %v79
    %v498 = vunpack.c.l.b16 %v80
    %v499 = vunpack.c.h.b16 %v80
    %v500 = vunpack.c.l.b16 %v81
    %v501 = vunpack.c.l.b16 %v82
    %v502 = vunpack.c.h.b16 %v82
    %v503 = vunpack.c.l.b16 %v83
    %v504 = vunpack.c.l.b16 %v84
    %v505 = vunpack.c.h.b16 %v84
    %v506 = vunpack.c.l.b16 %v85
    %v507 = vunpack.c.l.b16 %v86
    %v508 = vunpack.c.h.b16 %v86
    %v509 = vunpack.c.l.b16 %v87
    %v510 = vunpack.c.l.b16 %v88
    %v511 = vunpack.c.h.b16 %v88
    %v512 = vunpack.c.l.b16 %v89
    %v513 = vunpack.c.l.b16 %v90
    %v514 = vunpack.c.h.b16 %v90
    %v515 = vunpack.c.l.b16 %v91
    %v516 = vunpack.c.l.b16 %v92
    %v517 = vunpack.c.h.b16 %v92
    %v518 = vunpack.c.l.b16 %v93
    %v519 = vunpack.c.l.b16 %v94
    %v520 = vunpack.c.h.b16 %v94
    %v521 = vunpack.c.l.b16 %v95
    %v522 = vunpack.c.l.b16 %v96
    %v523 = vunpack.c.h.b16 %v96
    %v524 = vunpack.c.l.b16 %v97
    %v525 = vunpack.c.l.b16 %v98
    %v526 = vunpack.c.h.b16 %v98
    %v527 = vunpack.c.l.b16 %v99
    %v528 = vunpack.c.l.b16 %v100
    %v529 = vunpack.c.h.b16 %v100
    %v530 = vunpack.c.l.b16 %v101
    %v531 = vunpack.c.l.b16 %v102
    %v532 = vunpack.c.h.b16 %v102
    %v533 = vunpack.c.l.b16 %v103
    %v534 = vunpack.c.l.b16 %v104
    %v535 = vunpack.c.h.b16 %v104
    %v536 = vunpack.c.l.b16 %v105
    %v537 = vunpack.c.l.b16 %v106
    %v538 = vunpack.c.h.b16 %v106
    %v539 = vunpack.c.l.b16 %v107
    %v540 = vunpack.c.l.b16 %v108
    %v541 = vunpack.c.h.b16 %v108
    %v542 = vunpack.c.l.b16 %v109
    %v543 = vunpack.c.l.b16 %v110
    %v544 = vunpack.c.h.b16 %v110
    %v545 = vunpack.c.l.b16 %v111
    %v546 = vunpack.c.l.b16 %v112
    %v547 = vunpack.c.h.b16 %v112
    %v548 = vunpack.c.l.b16 %v113
    %v549 = vunpack.c.l.b16 %v114
    %v550 = vunpack.c.h.b16 %v114
    %v551 = vunpack.c.l.b16 %v115
    %v552 = vunpack.c.l.b16 %v116
    %v553 = vunpack.c.h.b16 %v116
    %v554 = vunpack.c.l.b16 %v117
    %v555 = vunpack.c.l.b16 %v118
    %v556 = vunpack.c.h.b16 %v118
    %v557 = vunpack.c.l.b16 %v119
    %v558 = vunpack.c.l.b16 %v120
    %v559 = vunpack.c.h.b16 %v120
    %v560 = vunpack.c.l.b16 %v121
    %v561 = vunpack.c.l.b16 %v122
    %v562 = vunpack.c.h.b16 %v122
    %v563 = vunpack.c.l.b16 %v123
    %v564 = vunpack.c.l.b16 %v124
    %v565 = vunpack.c.h.b16 %v124
    %v566 = vunpack.c.l.b16 %v125
    %v567 = vunpack.c.l.b16 %v126
    %v568 = vunpack.c.h.b16 %v126
    %v569 = vunpack.c.l.b16 %v127
    %v570 = vunpack.c.l.b16 %v128
    %v571 = vunpack.c.h.b16 %v128
    %v572 = vunpack.c.l.b16 %v129
    %v573 = vunpack.c.l.b16 %v130
    %v574 = vunpack.c.h.b16 %v130
    %v575 = vunpack.c.l.b16 %v131
    %v576 = vunpack.c.l.b16 %v132
    %v577 = vunpack.c.h.b16 %v132
    %v578 = vunpack.c.l.b16 %v133
    %v579 = vunpack.c.l.b16 %v134
    %v580 = vunpack.c.h.b16 %v134
    %v581 = vunpack.c.l.b16 %v135
    %v582 = vunpack.c.l.b16 %v136
    %v583 = vunpack.c.h.b16 %v136
    %v584 = vunpack.c.l.b16 %v137
    %v585 = vunpack.c.l.b16 %v138
    %v586 = vunpack.c.h.b16 %v138
    %v587 = vunpack.c.l.b16 %v139
    %v588 = vunpack.c.l.b16 %v140
    %v589 = vunpack.c.h.b16 %v140
    %v590 = vunpack.c.l.b16 %v141
    %v591 = vunpack.c.l.b16 %v142
    %v592 = vunpack.c.h.b16 %v142
    %v593 = vunpack.c.l.b16 %v143
    %v594 = vunpack.c.l.b16 %v144
    %v595 = vunpack.c.h.b16 %v144
    %v596 = vunpack.c.l.b16 %v145
    %v597 = vunpack.c.l.b16 %v146
    %v598 = vunpack.c.h.b16 %v146
    %v599 = vunpack.c.l.b16 %v147
    %v600 = vunpack.c.l.b16 %v148
    %v601 = vunpack.c.h.b16 %v148
    %v602 = vunpack.c.l.b16 %v149
    %v603 = vunpack.c.l.b16 %v150
    %v604 = vunpack.c.h.b16 %v150
    %v605 = vunpack.c.l.b16 %v151
    %v606 = vunpack.c.l.b16 %v152
    %v607 = vunpack.c.h.b16 %v152
    %v608 = vunpack.c.l.b16 %v153
    %v609 = vunpack.c.l.b16 %v154
    %v610 = vunpack.c.h.b16 %v154
    %v611 = vunpack.c.l.b16 %v155
    %v612 = vunpack.c.l.b16 %v156
    %v613 = vunpack.c.h.b16 %v156
    %v614 = vunpack.c.l.b16 %v157
    %v615 = vunpack.c.l.b16 %v158
    %v616 = vunpack.c.h.b16 %v158
    %v617 = vunpack.c.l.b16 %v159
    %v618 = vunpack.c.l.b16 %v160
    %v619 = vunpack.c.h.b16 %v160
    %v620 = vunpack.c.l.b16 %v161
    %v621 = vunpack.c.l.b16 %v162
    %v622 = vunpack.c.h.b16 %v162
    %v623 = vunpack.c.l.b16 %v163
    %v624 = vunpack.c.l.b16 %v164
    %v625 = vunpack.c.h.b16 %v164
    %v626 = vunpack.c.l.b16 %v165
    %v627 = vunpack.c.l.b16 %v166
    %v628 = vunpack.c.h.b16 %v166
    %v629 = vunpack.c.l.b16 %v167
    %v630 = vunpack.c.l.b16 %v168
    %v631 = vunpack.c.h.b16 %v168
    %v632 = vunpack.c.l.b16 %v169
    %v633 = vunpack.c.l.b16 %v170
    %v634 = vunpack.c.h.b16 %v170
    %v635 = vunpack.c.l.b16 %v171
    %v636 = vunpack.c.l.b16 %v172
    %v637 = vunpack.c.h.b16 %v172
    %v638 = vunpack.c.l.b16 %v173
    %v639 = vunpack.c.l.b16 %v174
    %v640 = vunpack.c.h.b16 %v174
    %v641 = vunpack.c.l.b16 %v175
    %v642 = vunpack.c.l.b16 %v176
    %v643 = vunpack.c.h.b16 %v176
    %v644 = vunpack.c.l.b16 %v177
    %v645 = vunpack.c.l.b16 %v178
    %v646 = vunpack.c.h.b16 %v178
    %v647 = vunpack.c.l.b16 %v179
    %v648 = vunpack.c.l.b16 %v180
    %v649 = vunpack.c.h.b16 %v180
    %v650 = vunpack.c.l.b16 %v181
    %v651 = vunpack.c.l.b16 %v182
    %v652 = vunpack.c.h.b16 %v182
    %v653 = vunpack.c.l.b16 %v183
    %v654 = vunpack.c.l.b16 %v184
    %v655 = vunpack.c.h.b16 %v184
    %v656 = vunpack.c.l.b16 %v185
    %v657 = vunpack.c.l.b16 %v186
    %v658 = vunpack.c.h.b16 %v186
    %v659 = vunpack.c.l.b16 %v187
    %v660 = vunpack.c.l.b16 %v188
    %v661 = vunpack.c.h.b16 %v188
    %v662 = vunpack.c.l.b16 %v189
    %v663 = vunpack.c.l.b16 %v190
    %v664 = vunpack.c.h.b16 %v190
    %v665 = vunpack.c.l.b16 %v191
    %v666 = vunpack.c.l.b16 %v192
    %v667 = vunpack.c.h.b16 %v192
    %v668 = vunpack.c.l.b16 %v193
    %v669 = vunpack.c.l.b16 %v194
    %v670 = vunpack.c.h.b16 %v194
    %v671 = vunpack.c.l.b16 %v195
    %v672 = vunpack.c.l.b16 %v196
    %v673 = vunpack.c.h.b16 %v196
    %v674 = vunpack.c.l.b16 %v197
    %v675 = vunpack.c.l.b16 %v198
    %v676 = vunpack.c.h.b16 %v198
    %v677 = vunpack.c.l.b16 %v199
    %v678 = vunpack.c.l.b16 %v200
    %v679 = vunpack.c.h.b16 %v200
    %v680 = vunpack.c.l.b16 %v201
    %v681 = vunpack.c.l.b16 %v202
    %v682 = vunpack.c.h.b16 %v202
    %v683 = vunpack.c.l.b16 %v203
    %v684 = vunpack.c.l.b16 %v204
    %v685 = vunpack.c.h.b16 %v204
    %v686 = vunpack.c.l.b16 %v205
    %v687 = vunpack.c.l.b16 %v206
    %v688 = vunpack.c.h.b16 %v206
    %v689 = vunpack.c.l.b16 %v207
    %v690 = vunpack.c.l.b16 %v208
    %v691 = vunpack.c.h.b16 %v208
    %v692 = vunpack.c.l.b16 %v209
    %v693 = vunpack.c.l.b16 %v210
    %v694 = vunpack.c.h.b16 %v210
    %v695 = vunpack.c.l.b16 %v211
    %v696 = vunpack.c.l.b16 %v212
    %v697 = vunpack.c.h.b16 %v212
    %v698 = vunpack.c.l.b16 %v213
    %v699 = vunpack.c.l.b16 %v214
    %v700 = vunpack.c.h.b16 %v214
    %v701 = vunpack.c.l.b16 %v215
    %v702 = vunpack.c.l.b16 %v216
    %v703 = vunpack.c.h.b16 %v216
    %v704 = vunpack.c.l.b16 %v217
    %v705 = vunpack.c.l.b16 %v218
    %v706 = vunpack.c.h.b16 %v218
    %v707 = vunpack.c.l.b16 %v219
    %v708 = vunpack.c.l.b16 %v220
    %v709 = vunpack.c.h.b16 %v220
    %v710 = vunpack.c.l.b16 %v221
    %v711 = vunpack.c.l.b16 %v222
    %v712 = vunpack.c.h.b16 %v222
    %v713 = vunpack.c.l.b16 %v223
    %v714 = vunpack.c.l.b16 %v224
    %v715 = vunpack.c.h.b16 %v224
    %v716 = vunpack.c.l.b16 %v225
    %v717 = vunpack.c.l.b16 %v226
    %v718 = vunpack.c.h.b16 %v226
    %v719 = vunpack.c.l.b16 %v227
    %v720 = vunpack.c.l.b16 %v228
    %v721 = vunpack.c.h.b16 %v228
    %v722 = vunpack.c.l.b16 %v229
    %v723 = vunpack.c.l.b16 %v230
    %v724 = vunpack.c.h.b16 %v230
    %v725 = vunpack.c.l.b16 %v231
    %v726 = vunpack.c.l.b16 %v232
    %v727 = vunpack.c.h.b16 %v232
    %v728 = vunpack.c.l.b16 %v233
    %v729 = vunpack.c.l.b16 %v234
    %v730 = vunpack.c.h.b16 %v234
    %v731 = vunpack.c.l.b16 %v235
    %v732 = vunpack.c.l.b16 %v236
    %v733 = vunpack.c.h.b16 %v236
    %v734 = vunpack.c.l.b16 %v237
    %v735 = vunpack.c.l.b16 %v238
    %v736 = vunpack.c.h.b16 %v238
    %v737 = vunpack.c.l.b16 %v239
    %v738 = vunpack.c.l.b16 %v240
    %v739 = vunpack.c.h.b16 %v240
    %v740 = vunpack.c.l.b16 %v241
    %v741 = vunpack.c.l.b16 %v242
    %v742 = vunpack.c.h.b16 %v242
    %v743 = vunpack.c.l.b16 %v243
    %v744 = vunpack.c.l.b16 %v244
    %v745 = vunpack.c.h.b16 %v244
    %v746 = vunpack.c.l.b16 %v245
    %v747 = vunpack.c.l.b16 %v246
    %v748 = vunpack.c.h.b16 %v246
    %v749 = vunpack.c.l.b16 %v247
    %v750 = vunpack.c.l.b16 %v248
    %v751 = vunpack.c.h.b16 %v248
    %v752 = vunpack.c.l.b16 %v249
    %v753 = vunpack.c.l.b16 %v250
    %v754 = vunpack.c.h.b16 %v250
    %v755 = vunpack.c.l.b16 %v251
    %v756 = vunpack.c.l.b16 %v252
    %v757 = vunpack.c.h.b16 %v252
    %v758 = vunpack.c.l.b16 %v253
    %v759 = vunpack.c.l.b16 %v254
    %v760 = vunpack.c.h.b16 %v254
    %v761 = vunpack.c.l.b16 %v255
    %v762 = vunpack.c.l.b16 %v256
    %v763 = vunpack.c.h.b16 %v256
    %v764 = vunpack.c.l.b16 %v257
    %v765 = vpack.c.b16 %v474, %v471
    %v766 = vpack.c.b16 %v475, %v472
    %v767 = vpack.c.b16 %v476, %v473
    %v768 = vpack.c.b16 %v480, %v477
    %v769 = vpack.c.b16 %v481, %v478
    %v770 = vpack.c.b16 %v482, %v479
    %v771 = vpack.c.b16 %v486, %v483
    %v772 = vpack.c.b16 %v487, %v484
    %v773 = vpack.c.b16 %v488, %v485
    %v774 = vpack.c.b16 %v492, %v489
    %v775 = vpack.c.b16 %v493, %v490
    %v776 = vpack.c.b16 %v494, %v491
    %v777 = vpack.c.b16 %v498, %v495
    %v778 = vpack.c.b16 %v499, %v496
    %v779 = vpack.c.b16 %v500, %v497
    %v780 = vpack.c.b16 %v504, %v501
    %v781 = vpack.c.b16 %v505, %v502
    %v782 = vpack.c.b16 %v506, %v503
    %v783 = vpack.c.b16 %v510, %v507
    %v784 = vpack.c.b16 %v511, %v508
    %v785 = vpack.c.b16 %v512, %v509
    %v786 = vpack.c.b16 %v516, %v513
    %v787 = vpack.c.b16 %v517, %v514
    %v788 = vpack.c.b16 %v518, %v515
    %v789 = vpack.c.b16 %v522, %v519
    %v790 = vpack.c.b16 %v523, %v520
    %v791 = vpack.c.b16 %v524, %v521
    %v792 = vpack.c.b16 %v528, %v525
    %v793 = vpack.c.b16 %v529, %v526
    %v794 = vpack.c.b16 %v530, %v527
    %v795 = vpack.c.b16 %v534, %v531
    %v796 = vpack.c.b16 %v535, %v532
    %v797 = vpack.c.b16 %v536, %v533
    %v798 = vpack.c.b16 %v540, %v537
    %v799 = vpack.c.b16 %v541, %v538
    %v800 = vpack.c.b16 %v542, %v539
    %v801 = vpack.c.b16 %v546, %v543
    %v802 = vpack.c.b16 %v547, %v544
    %v803 = vpack.c.b16 %v548, %v545
    %v804 = vpack.c.b16 %v552, %v549
    %v805 = vpack.c.b16 %v553, %v550
    %v806 = vpack.c.b16 %v554, %v551
    %v807 = vpack.c.b16 %v558, %v555
    %v808 = vpack.c.b16 %v559, %v556
    %v809 = vpack.c.b16 %v560, %v557
    %v810 = vpack.c.b16 %v564, %v561
    %v811 = vpack.c.b16 %v565, %v562
    %v812 = vpack.c.b16 %v566, %v563
    %v813 = vpack.c.b16 %v570, %v567
    %v814 = vpack.c.b16 %v571, %v568
    %v815 = vpack.c.b16 %v572, %v569
    %v816 = vpack.c.b16 %v576, %v573
    %v817 = vpack.c.b16 %v577, %v574
    %v818 = vpack.c.b16 %v578, %v575
    %v819 = vpack.c.b16 %v582, %v579
    %v820 = vpack.c.b16 %v583, %v580
    %v821 = vpack.c.b16 %v584, %v581
    %v822 = vpack.c.b16 %v588, %v585
    %v823 = vpack.c.b16 %v589, %v586
    %v824 = vpack.c.b16 %v590, %v587
    %v825 = vpack.c.b16 %v594, %v591
    %v826 = vpack.c.b16 %v595, %v592
    %v827 = vpack.c.b16 %v596, %v593
    %v828 = vpack.c.b16 %v600, %v597
    %v829 = vpack.c.b16 %v601, %v598
    %v830 = vpack.c.b16 %v602, %v599
    %v831 = vpack.c.b16 %v606, %v603
    %v832 = vpack.c.b16 %v607, %v604
    %v833 = vpack.c.b16 %v608, %v605
    %v834 = vpack.c.b16 %v612, %v609
    %v835 = vpack.c.b16 %v613, %v610
    %v836 = vpack.c.b16 %v614, %v611
    %v837 = vpack.c.b16 %v618, %v615
    %v838 = vpack.c.b16 %v619, %v616
    %v839 = vpack.c.b16 %v620, %v617
    %v840 = vpack.c.b16 %v624, %v621
    %v841 = vpack.c.b16 %v625, %v622
    %v842 = vpack.c.b16 %v626, %v623
    %v843 = vpack.c.b16 %v630, %v627
    %v844 = vpack.c.b16 %v631, %v628
    %v845 = vpack.c.b16 %v632, %v629
    %v846 = vpack.c.b16 %v636, %v633
    %v847 = vpack.c.b16 %v637, %v634
    %v848 = vpack.c.b16 %v638, %v635
    %v849 = vpack.c.b16 %v642, %v639
    %v850 = vpack.c.b16 %v643, %v640
    %v851 = vpack.c.b16 %v644, %v641
    %v852 = vpack.c.b16 %v648, %v645
    %v853 = vpack.c.b16 %v649, %v646
    %v854 = vpack.c.b16 %v650, %v647
    %v855 = vpack.c.b16 %v654, %v651
    %v856 = vpack.c.b16 %v655, %v652
    %v857 = vpack.c.b16 %v656, %v653
    %v858 = vpack.c.b16 %v660, %v657
    %v859 = vpack.c.b16 %v661, %v658
    %v860 = vpack.c.b16 %v662, %v659
    %v861 = vpack.c.b16 %v666, %v663
    %v862 = vpack.c.b16 %v667, %v664
    %v863 = vpack.c.b16 %v668, %v665
    %v864 = vpack.c.b16 %v672, %v669
    %v865 = vpack.c.b16 %v673, %v670
    %v866 = vpack.c.b16 %v674, %v671
    %v867 = vpack.c.b16 %v678, %v675
    %v868 = vpack.c.b16 %v679, %v676
    %v869 = vpack.c.b16 %v680, %v677
    %v870 = vpack.c.b16 %v684, %v681
    %v871 = vpack.c.b16 %v685, %v682
    %v872 = vpack.c.b16 %v686, %v683
    %v873 = vpack.c.b16 %v690, %v687
    %v874 = vpack.c.b16 %v691, %v688
    %v875 = vpack.c.b16 %v692, %v689
    %v876 = vpack.c.b16 %v696, %v693
    %v877 = vpack.c.b16 %v697, %v694
    %v878 = vpack.c.b16 %v698, %v695
    %v879 = vpack.c.b16 %v702, %v699
    %v880 = vpack.c.b16 %v703, %v700
    %v881 = vpack.c.b16 %v704, %v701
    %v882 = vpack.c.b16 %v708, %v705
    %v883 = vpack.c.b16 %v709, %v706
    %v884 = vpack.c.b16 %v710, %v707
    %v885 = vpack.c.b16 %v714, %v711
    %v886 = vpack.c.b16 %v715, %v712
    %v887 = vpack.c.b16 %v716, %v713
    %v888 = vpack.c.b16 %v720, %v717
    %v889 = vpack.c.b16 %v721, %v718
    %v890 = vpack.c.b16 %v722, %v719
    %v891 = vpack.c.b16 %v726, %v723
    %v892 = vpack.c.b16 %v727, %v724
    %v893 = vpack.c.b16 %v728, %v725
    %v894 = vpack.c.b16 %v732, %v729
    %v895 = vpack.c.b16 %v733, %v730
    %v896 = vpack.c.b16 %v734, %v731
    %v897 = vpack.c.b16 %v738, %v735
    %v898 = vpack.c.b16 %v739, %v736
    %v899 = vpack.c.b16 %v740, %v737
    %v900 = vpack.c.b16 %v744, %v741
    %v901 = vpack.c.b16 %v745, %v742
    %v902 = vpack.c.b16 %v746, %v743
    %v903 = vpack.c.b16 %v750, %v747
    %v904 = vpack.c.b16 %v751, %v748
    %v905 = vpack.c.b16 %v752, %v749
    %v906 = vpack.c.b16 %v756, %v753
    %v907 = vpack.c.b16 %v757, %v754
    %v908 = vpack.c.b16 %v758, %v755
    %v909 = vpack.c.b16 %v762, %v759
    %v910 = vpack.c.b16 %v763, %v760
    %v911 = vpack.c.b16 %v764, %v761
    %vm1059 = vcmask 130048
    %v1061 = vsel %vm1059, %v61, 0
    %1063 = vmatprep.subr.bf16.mxu0 %v766
    %1064 = vmatpush1.bf16.msra.mxu0 %v765
    %1065 = vmatprep.subr.bf16.mxu0 %v769
    %1066 = vmatpush1.bf16.msra.mxu0 %v768
    %1067 = vmatprep.subr.bf16.mxu0 %v772
    %1068 = vmatpush1.bf16.msra.mxu0 %v771
    %1069 = vmatprep.subr.bf16.mxu0 %v775
    %1070 = vmatpush1.bf16.msra.mxu0 %v774
    %1071 = vmatprep.subr.bf16.mxu0 %v778
    %1072 = vmatpush1.bf16.msra.mxu0 %v777
    %1073 = vmatprep.subr.bf16.mxu0 %v781
    %1074 = vmatpush1.bf16.msra.mxu0 %v780
    %1075 = vmatprep.subr.bf16.mxu0 %v784
    %1076 = vmatpush1.bf16.msra.mxu0 %v783
    %1077 = vmatprep.subr.bf16.mxu0 %v787
    %1078 = vmatpush1.bf16.msra.mxu0 %v786
    %1079 = vmatprep.subr.bf16.mxu0 %v790
    %1080 = vmatpush1.bf16.msra.mxu0 %v789
    %1081 = vmatprep.subr.bf16.mxu0 %v793
    %1082 = vmatpush1.bf16.msra.mxu0 %v792
    %1083 = vmatprep.subr.bf16.mxu0 %v796
    %1084 = vmatpush1.bf16.msra.mxu0 %v795
    %1085 = vmatprep.subr.bf16.mxu0 %v799
    %1086 = vmatpush1.bf16.msra.mxu0 %v798
    %1087 = vmatprep.subr.bf16.mxu0 %v802
    %1088 = vmatpush1.bf16.msra.mxu0 %v801
    %1089 = vmatprep.subr.bf16.mxu0 %v805
    %1090 = vmatpush1.bf16.msra.mxu0 %v804
    %1091 = vmatprep.subr.bf16.mxu0 %v808
    %1092 = vmatpush1.bf16.msra.mxu0 %v807
    %1093 = vmatprep.subr.bf16.mxu0 %v811
    %1094 = vmatpush1.bf16.msra.mxu0 %v810
    %1095 = vmatprep.mubr.bf16.mxu0 %v56
    %1096 = vmatmul.mubr.bf16.gmra.mrb[0].mxu0 %v55
    %v1097 = vpop.f32.mrb[0].mxu0
    %v1098 = vadd.f32 %v263, %v1097
    %v1099 = vpop.f32.mrb[0].mxu0
    %v1100 = vadd.f32 %v267, %v1099
    %v1101 = vpop.f32.mrb[0].mxu0
    %v1102 = vadd.f32 %v263, %v1101
    %v1103 = vpop.f32.mrb[0].mxu0
    %v1104 = vadd.f32 %v267, %v1103
    %1105 = vdwg.mxu0
    %1106 = vmatprep.subr.bf16.mxu0 %v814
    %1107 = vmatpush1.bf16.msra.mxu0 %v813
    %1108 = vmatprep.subr.bf16.mxu0 %v817
    %1109 = vmatpush1.bf16.msra.mxu0 %v816
    %1110 = vmatprep.subr.bf16.mxu0 %v820
    %1111 = vmatpush1.bf16.msra.mxu0 %v819
    %1112 = vmatprep.subr.bf16.mxu0 %v823
    %1113 = vmatpush1.bf16.msra.mxu0 %v822
    %1114 = vmatprep.subr.bf16.mxu0 %v826
    %1115 = vmatpush1.bf16.msra.mxu0 %v825
    %1116 = vmatprep.subr.bf16.mxu0 %v829
    %1117 = vmatpush1.bf16.msra.mxu0 %v828
    %1118 = vmatprep.subr.bf16.mxu0 %v832
    %1119 = vmatpush1.bf16.msra.mxu0 %v831
    %1120 = vmatprep.subr.bf16.mxu0 %v835
    %1121 = vmatpush1.bf16.msra.mxu0 %v834
    %1122 = vmatprep.subr.bf16.mxu0 %v838
    %1123 = vmatpush1.bf16.msra.mxu0 %v837
    %1124 = vmatprep.subr.bf16.mxu0 %v841
    %1125 = vmatpush1.bf16.msra.mxu0 %v840
    %1126 = vmatprep.subr.bf16.mxu0 %v844
    %1127 = vmatpush1.bf16.msra.mxu0 %v843
    %1128 = vmatprep.subr.bf16.mxu0 %v847
    %1129 = vmatpush1.bf16.msra.mxu0 %v846
    %1130 = vmatprep.subr.bf16.mxu0 %v850
    %1131 = vmatpush1.bf16.msra.mxu0 %v849
    %1132 = vmatprep.subr.bf16.mxu0 %v853
    %1133 = vmatpush1.bf16.msra.mxu0 %v852
    %1134 = vmatprep.subr.bf16.mxu0 %v856
    %1135 = vmatpush1.bf16.msra.mxu0 %v855
    %1136 = vmatprep.subr.bf16.mxu0 %v859
    %1137 = vmatpush1.bf16.msra.mxu0 %v858
    %1138 = vmatprep.mubr.bf16.mxu0 %v58
    %1139 = vmatmul.mubr.bf16.gmra.mrb[0].mxu0 %v57
    %v1140 = vpop.f32.mrb[0].mxu0
    %v1141 = vadd.f32 %v1098, %v1140
    %v1142 = vpop.f32.mrb[0].mxu0
    %v1143 = vadd.f32 %v1100, %v1142
    %v1144 = vpop.f32.mrb[0].mxu0
    %v1145 = vadd.f32 %v1102, %v1144
    %v1146 = vpop.f32.mrb[0].mxu0
    %v1147 = vadd.f32 %v1104, %v1146
    %1148 = vdwg.mxu0
    %1149 = vmatprep.subr.bf16.mxu0 %v862
    %1150 = vmatpush1.bf16.msra.mxu0 %v861
    %1151 = vmatprep.subr.bf16.mxu0 %v865
    %1152 = vmatpush1.bf16.msra.mxu0 %v864
    %1153 = vmatprep.subr.bf16.mxu0 %v868
    %1154 = vmatpush1.bf16.msra.mxu0 %v867
    %1155 = vmatprep.subr.bf16.mxu0 %v871
    %1156 = vmatpush1.bf16.msra.mxu0 %v870
    %1157 = vmatprep.subr.bf16.mxu0 %v874
    %1158 = vmatpush1.bf16.msra.mxu0 %v873
    %1159 = vmatprep.subr.bf16.mxu0 %v877
    %1160 = vmatpush1.bf16.msra.mxu0 %v876
    %1161 = vmatprep.subr.bf16.mxu0 %v880
    %1162 = vmatpush1.bf16.msra.mxu0 %v879
    %1163 = vmatprep.subr.bf16.mxu0 %v883
    %1164 = vmatpush1.bf16.msra.mxu0 %v882
    %1165 = vmatprep.subr.bf16.mxu0 %v886
    %1166 = vmatpush1.bf16.msra.mxu0 %v885
    %1167 = vmatprep.subr.bf16.mxu0 %v889
    %1168 = vmatpush1.bf16.msra.mxu0 %v888
    %1169 = vmatprep.subr.bf16.mxu0 %v892
    %1170 = vmatpush1.bf16.msra.mxu0 %v891
    %1171 = vmatprep.subr.bf16.mxu0 %v895
    %1172 = vmatpush1.bf16.msra.mxu0 %v894
    %1173 = vmatprep.subr.bf16.mxu0 %v898
    %1174 = vmatpush1.bf16.msra.mxu0 %v897
    %1175 = vmatprep.subr.bf16.mxu0 %v901
    %1176 = vmatpush1.bf16.msra.mxu0 %v900
    %1177 = vmatprep.subr.bf16.mxu0 %v904
    %1178 = vmatpush1.bf16.msra.mxu0 %v903
    %1179 = vmatprep.subr.bf16.mxu0 %v907
    %1180 = vmatpush1.bf16.msra.mxu0 %v906
    %1181 = vmatprep.mubr.bf16.mxu0 %v60
    %1182 = vmatmul.mubr.bf16.gmra.mrb[0].mxu0 %v59
    %v1183 = vpop.f32.mrb[0].mxu0
    %v1184 = vadd.f32 %v1141, %v1183
    %v1185 = vpop.f32.mrb[0].mxu0
    %v1186 = vadd.f32 %v1143, %v1185
    %v1187 = vpop.f32.mrb[0].mxu0
    %v1188 = vadd.f32 %v1145, %v1187
    %v1189 = vpop.f32.mrb[0].mxu0
    %v1190 = vadd.f32 %v1147, %v1189
    %1191 = vdwg.mxu0
    %1192 = vmatprep.subr.bf16.mxu0 %v910
    %1193 = vmatpush1.bf16.msra.mxu0 %v909
    %1194 = vmatprep.subr.bf16.mxu0 0
    %1195 = vmatpush1.bf16.msra.mxu0 0
    %1196 = vmatprep.subr.bf16.mxu0 0
    %1197 = vmatpush1.bf16.msra.mxu0 0
    %1198 = vmatprep.subr.bf16.mxu0 0
    %1199 = vmatpush1.bf16.msra.mxu0 0
    %1200 = vmatprep.subr.bf16.mxu0 0
    %1201 = vmatpush1.bf16.msra.mxu0 0
    %1202 = vmatprep.subr.bf16.mxu0 0
    %1203 = vmatpush1.bf16.msra.mxu0 0
    %1204 = vmatprep.subr.bf16.mxu0 0
    %1205 = vmatpush1.bf16.msra.mxu0 0
    %1206 = vmatprep.subr.bf16.mxu0 0
    %1207 = vmatpush1.bf16.msra.mxu0 0
    %1208 = vmatprep.subr.bf16.mxu0 0
    %1209 = vmatpush1.bf16.msra.mxu0 0
    %1210 = vmatprep.subr.bf16.mxu0 0
    %1211 = vmatpush1.bf16.msra.mxu0 0
    %1212 = vmatprep.subr.bf16.mxu0 0
    %1213 = vmatpush1.bf16.msra.mxu0 0
    %1214 = vmatprep.subr.bf16.mxu0 0
    %1215 = vmatpush1.bf16.msra.mxu0 0
    %1216 = vmatprep.subr.bf16.mxu0 0
    %1217 = vmatpush1.bf16.msra.mxu0 0
    %1218 = vmatprep.subr.bf16.mxu0 0
    %1219 = vmatpush1.bf16.msra.mxu0 0
    %1220 = vmatprep.subr.bf16.mxu0 0
    %1221 = vmatpush1.bf16.msra.mxu0 0
    %1222 = vmatprep.subr.bf16.mxu0 0
    %1223 = vmatpush1.bf16.msra.mxu0 0
    %1224 = vmatprep.mubr.bf16.mxu0 0
    %1225 = vmatmul.mubr.bf16.gmra.mrb[0].mxu0 %v1061
    %v1226 = vpop.f32.mrb[0].mxu0
    %v1227 = vadd.f32 %v1184, %v1226
    %v1228 = vpop.f32.mrb[0].mxu0
    %v1229 = vadd.f32 %v1186, %v1228
    %v1230 = vpop.f32.mrb[0].mxu0
    %v1231 = vadd.f32 %v1188, %v1230
    %v1232 = vpop.f32.mrb[0].mxu0
    %v1233 = vadd.f32 %v1190, %v1232
    %1234 = vdwg.mxu0
    %1235 = vmatprep.subr.bf16.mxu0 0
    %1236 = vmatpush1.bf16.msra.mxu0 %v767
    %1237 = vmatprep.subr.bf16.mxu0 0
    %1238 = vmatpush1.bf16.msra.mxu0 %v770
    %1239 = vmatprep.subr.bf16.mxu0 0
    %1240 = vmatpush1.bf16.msra.mxu0 %v773
    %1241 = vmatprep.subr.bf16.mxu0 0
    %1242 = vmatpush1.bf16.msra.mxu0 %v776
    %1243 = vmatprep.subr.bf16.mxu0 0
    %1244 = vmatpush1.bf16.msra.mxu0 %v779
    %1245 = vmatprep.subr.bf16.mxu0 0
    %1246 = vmatpush1.bf16.msra.mxu0 %v782
    %1247 = vmatprep.subr.bf16.mxu0 0
    %1248 = vmatpush1.bf16.msra.mxu0 %v785
    %1249 = vmatprep.subr.bf16.mxu0 0
    %1250 = vmatpush1.bf16.msra.mxu0 %v788
    %1251 = vmatprep.subr.bf16.mxu0 0
    %1252 = vmatpush1.bf16.msra.mxu0 %v791
    %1253 = vmatprep.subr.bf16.mxu0 0
    %1254 = vmatpush1.bf16.msra.mxu0 %v794
    %1255 = vmatprep.subr.bf16.mxu0 0
    %1256 = vmatpush1.bf16.msra.mxu0 %v797
    %1257 = vmatprep.subr.bf16.mxu0 0
    %1258 = vmatpush1.bf16.msra.mxu0 %v800
    %1259 = vmatprep.subr.bf16.mxu0 0
    %1260 = vmatpush1.bf16.msra.mxu0 %v803
    %1261 = vmatprep.subr.bf16.mxu0 0
    %1262 = vmatpush1.bf16.msra.mxu0 %v806
    %1263 = vmatprep.subr.bf16.mxu0 0
    %1264 = vmatpush1.bf16.msra.mxu0 %v809
    %1265 = vmatprep.subr.bf16.mxu0 0
    %1266 = vmatpush1.bf16.msra.mxu0 %v812
    %1267 = vmatprep.mubr.bf16.mxu0 %v56
    %1268 = vmatmul.mubr.bf16.gmra.mrb[0].mxu0 %v55
    %v1269 = vpop.f32.mrb[0].mxu0
    %v1270 = vadd.f32 %v271, %v1269
    %v1271 = vpop.f32.mrb[0].mxu0
    %v1272 = vpop.f32.mrb[0].mxu0
    %v1273 = vadd.f32 %v271, %v1272
    %v1274 = vpop.f32.mrb[0].mxu0
    %1275 = vdwg.mxu0
    %1276 = vmatprep.subr.bf16.mxu0 0
    %1277 = vmatpush1.bf16.msra.mxu0 %v815
    %1278 = vmatprep.subr.bf16.mxu0 0
    %1279 = vmatpush1.bf16.msra.mxu0 %v818
    %1280 = vmatprep.subr.bf16.mxu0 0
    %1281 = vmatpush1.bf16.msra.mxu0 %v821
    %1282 = vmatprep.subr.bf16.mxu0 0
    %1283 = vmatpush1.bf16.msra.mxu0 %v824
    %1284 = vmatprep.subr.bf16.mxu0 0
    %1285 = vmatpush1.bf16.msra.mxu0 %v827
    %1286 = vmatprep.subr.bf16.mxu0 0
    %1287 = vmatpush1.bf16.msra.mxu0 %v830
    %1288 = vmatprep.subr.bf16.mxu0 0
    %1289 = vmatpush1.bf16.msra.mxu0 %v833
    %1290 = vmatprep.subr.bf16.mxu0 0
    %1291 = vmatpush1.bf16.msra.mxu0 %v836
    %1292 = vmatprep.subr.bf16.mxu0 0
    %1293 = vmatpush1.bf16.msra.mxu0 %v839
    %1294 = vmatprep.subr.bf16.mxu0 0
    %1295 = vmatpush1.bf16.msra.mxu0 %v842
    %1296 = vmatprep.subr.bf16.mxu0 0
    %1297 = vmatpush1.bf16.msra.mxu0 %v845
    %1298 = vmatprep.subr.bf16.mxu0 0
    %1299 = vmatpush1.bf16.msra.mxu0 %v848
    %1300 = vmatprep.subr.bf16.mxu0 0
    %1301 = vmatpush1.bf16.msra.mxu0 %v851
    %1302 = vmatprep.subr.bf16.mxu0 0
    %1303 = vmatpush1.bf16.msra.mxu0 %v854
    %1304 = vmatprep.subr.bf16.mxu0 0
    %1305 = vmatpush1.bf16.msra.mxu0 %v857
    %1306 = vmatprep.subr.bf16.mxu0 0
    %1307 = vmatpush1.bf16.msra.mxu0 %v860
    %1308 = vmatprep.mubr.bf16.mxu0 %v58
    %1309 = vmatmul.mubr.bf16.gmra.mrb[0].mxu0 %v57
    %v1310 = vpop.f32.mrb[0].mxu0
    %v1311 = vadd.f32 %v1270, %v1310
    %v1312 = vpop.f32.mrb[0].mxu0
    %v1313 = vpop.f32.mrb[0].mxu0
    %v1314 = vadd.f32 %v1273, %v1313
    %v1315 = vpop.f32.mrb[0].mxu0
    %1316 = vdwg.mxu0
    %1317 = vmatprep.subr.bf16.mxu0 0
    %1318 = vmatpush1.bf16.msra.mxu0 %v863
    %1319 = vmatprep.subr.bf16.mxu0 0
    %1320 = vmatpush1.bf16.msra.mxu0 %v866
    %1321 = vmatprep.subr.bf16.mxu0 0
    %1322 = vmatpush1.bf16.msra.mxu0 %v869
    %1323 = vmatprep.subr.bf16.mxu0 0
    %1324 = vmatpush1.bf16.msra.mxu0 %v872
    %1325 = vmatprep.subr.bf16.mxu0 0
    %1326 = vmatpush1.bf16.msra.mxu0 %v875
    %1327 = vmatprep.subr.bf16.mxu0 0
    %1328 = vmatpush1.bf16.msra.mxu0 %v878
    %1329 = vmatprep.subr.bf16.mxu0 0
    %1330 = vmatpush1.bf16.msra.mxu0 %v881
    %1331 = vmatprep.subr.bf16.mxu0 0
    %1332 = vmatpush1.bf16.msra.mxu0 %v884
    %1333 = vmatprep.subr.bf16.mxu0 0
    %1334 = vmatpush1.bf16.msra.mxu0 %v887
    %1335 = vmatprep.subr.bf16.mxu0 0
    %1336 = vmatpush1.bf16.msra.mxu0 %v890
    %1337 = vmatprep.subr.bf16.mxu0 0
    %1338 = vmatpush1.bf16.msra.mxu0 %v893
    %1339 = vmatprep.subr.bf16.mxu0 0
    %1340 = vmatpush1.bf16.msra.mxu0 %v896
    %1341 = vmatprep.subr.bf16.mxu0 0
    %1342 = vmatpush1.bf16.msra.mxu0 %v899
    %1343 = vmatprep.subr.bf16.mxu0 0
    %1344 = vmatpush1.bf16.msra.mxu0 %v902
    %1345 = vmatprep.subr.bf16.mxu0 0
    %1346 = vmatpush1.bf16.msra.mxu0 %v905
    %1347 = vmatprep.subr.bf16.mxu0 0
    %1348 = vmatpush1.bf16.msra.mxu0 %v908
    %1349 = vmatprep.mubr.bf16.mxu0 %v60
    %1350 = vmatmul.mubr.bf16.gmra.mrb[0].mxu0 %v59
    %v1351 = vpop.f32.mrb[0].mxu0
    %v1352 = vadd.f32 %v1311, %v1351
    %v1353 = vpop.f32.mrb[0].mxu0
    %v1354 = vpop.f32.mrb[0].mxu0
    %v1355 = vadd.f32 %v1314, %v1354
    %v1356 = vpop.f32.mrb[0].mxu0
    %1357 = vdwg.mxu0
    %1358 = vmatprep.subr.bf16.mxu0 0
    %1359 = vmatpush1.bf16.msra.mxu0 %v911
    %1360 = vmatprep.subr.bf16.mxu0 0
    %1361 = vmatpush1.bf16.msra.mxu0 0
    %1362 = vmatprep.subr.bf16.mxu0 0
    %1363 = vmatpush1.bf16.msra.mxu0 0
    %1364 = vmatprep.subr.bf16.mxu0 0
    %1365 = vmatpush1.bf16.msra.mxu0 0
    %1366 = vmatprep.subr.bf16.mxu0 0
    %1367 = vmatpush1.bf16.msra.mxu0 0
    %1368 = vmatprep.subr.bf16.mxu0 0
    %1369 = vmatpush1.bf16.msra.mxu0 0
    %1370 = vmatprep.subr.bf16.mxu0 0
    %1371 = vmatpush1.bf16.msra.mxu0 0
    %1372 = vmatprep.subr.bf16.mxu0 0
    %1373 = vmatpush1.bf16.msra.mxu0 0
    %1374 = vmatprep.subr.bf16.mxu0 0
    %1375 = vmatpush1.bf16.msra.mxu0 0
    %1376 = vmatprep.subr.bf16.mxu0 0
    %1377 = vmatpush1.bf16.msra.mxu0 0
    %1378 = vmatprep.subr.bf16.mxu0 0
    %1379 = vmatpush1.bf16.msra.mxu0 0
    %1380 = vmatprep.subr.bf16.mxu0 0
    %1381 = vmatpush1.bf16.msra.mxu0 0
    %1382 = vmatprep.subr.bf16.mxu0 0
    %1383 = vmatpush1.bf16.msra.mxu0 0
    %1384 = vmatprep.subr.bf16.mxu0 0
    %1385 = vmatpush1.bf16.msra.mxu0 0
    %1386 = vmatprep.subr.bf16.mxu0 0
    %1387 = vmatpush1.bf16.msra.mxu0 0
    %1388 = vmatprep.subr.bf16.mxu0 0
    %1389 = vmatpush1.bf16.msra.mxu0 0
    %1390 = vmatprep.mubr.bf16.mxu0 0
    %1391 = vmatmul.mubr.bf16.gmra.mrb[0].mxu0 %v1061
    %v1392 = vpop.f32.mrb[0].mxu0
    %v1393 = vadd.f32 %v1352, %v1392
    %v1394 = vpop.f32.mrb[0].mxu0
    %v1395 = vpop.f32.mrb[0].mxu0
    %v1396 = vadd.f32 %v1355, %v1395
    %v1397 = vpop.f32.mrb[0].mxu0
    %1398 = vdwg.mxu0
    %v1399 = vmax.f32 %v1227, 0.0
    %v1400 = vmax.f32 %v1229, 0.0
    %v1401 = vmax.f32 %v1393, 0.0
    %v1402 = vmax.f32 %v1231, 0.0
    %v1403 = vmax.f32 %v1233, 0.0
    %v1404 = vmax.f32 %v1396, 0.0
    %v1405 = vpack.c.bf16 %v1402, %v1399
    %v1406 = vpack.c.bf16 %v1403, %v1400
    %v1407 = vpack.c.bf16 %v1404, %v1401
    %v1408 = vld [vmem:[%s3] sm:$0xf]
    %v1409 = vld [vmem:[%s3 + $0x4] sm:$0xf]
    %v1410 = vld [vmem:[%s3 + $0x8] sm:$0xf]
    %v1411 = vld [vmem:[%s3 + $0xc] sm:$0xf]
    %v1412 = vld [vmem:[%s3 + $0x10] sm:$0xf]
    %v1413 = vld [vmem:[%s3 + $0x14] sm:$0xf]
    %v1414 = vld [vmem:[%s3 + $0x18] sm:$0xf]
    %v1415 = vld [vmem:[%s3 + $0x1c] sm:$0xf]
    %v1416 = vld [vmem:[%s3 + $0x20] sm:$0xf]
    %v1417 = vld [vmem:[%s3 + $0x24] sm:$0xf]
    %v1418 = vld [vmem:[%s3 + $0x28] sm:$0xf]
    %v1419 = vld [vmem:[%s3 + $0x2c] sm:$0xf]
    %v1420 = vld [vmem:[%s3 + $0x30] sm:$0xf]
    %v1421 = vld [vmem:[%s3 + $0x34] sm:$0xf]
    %v1422 = vld [vmem:[%s3 + $0x38] sm:$0xf]
    %v1423 = vld [vmem:[%s3 + $0x3c] sm:$0xf]
    %v1424 = vld [vmem:[%s3 + $0x40] sm:$0xf]
    %v1425 = vld [vmem:[%s3 + $0x44] sm:$0xf]
    %v1426 = vld [vmem:[%s3 + $0x48] sm:$0xf]
    %v1427 = vld [vmem:[%s3 + $0x4c] sm:$0xf]
    %v1428 = vld [vmem:[%s3 + $0x50] sm:$0xf]
    %v1429 = vld [vmem:[%s3 + $0x54] sm:$0xf]
    %v1430 = vld [vmem:[%s3 + $0x58] sm:$0xf]
    %v1431 = vld [vmem:[%s3 + $0x5c] sm:$0xf]
    %v1432 = vld [vmem:[%s3 + $0x60] sm:$0xf]
    %v1433 = vld [vmem:[%s3 + $0x64] sm:$0xf]
    %v1434 = vld [vmem:[%s3 + $0x68] sm:$0xf]
    %v1435 = vld [vmem:[%s3 + $0x6c] sm:$0xf]
    %v1436 = vld [vmem:[%s3 + $0x70] sm:$0xf]
    %v1437 = vld [vmem:[%s3 + $0x74] sm:$0xf]
    %v1438 = vld [vmem:[%s3 + $0x78] sm:$0xf]
    %v1439 = vld [vmem:[%s3 + $0x7c] sm:$0xf]
    %v1440 = vld [vmem:[%s3 + $0x80] sm:$0xf]
    %v1441 = vld [vmem:[%s3 + $0x84] sm:$0xf]
    %v1442 = vld [vmem:[%s3 + $0x88] sm:$0xf]
    %v1443 = vld [vmem:[%s3 + $0x8c] sm:$0xf]
    %v1444 = vld [vmem:[%s3 + $0x90] sm:$0xf]
    %v1445 = vld [vmem:[%s3 + $0x94] sm:$0xf]
    %v1446 = vld [vmem:[%s3 + $0x98] sm:$0xf]
    %v1447 = vld [vmem:[%s3 + $0x9c] sm:$0xf]
    %v1448 = vld [vmem:[%s3 + $0xa0] sm:$0xf]
    %v1449 = vld [vmem:[%s3 + $0xa4] sm:$0xf]
    %v1450 = vld [vmem:[%s3 + $0xa8] sm:$0xf]
    %v1451 = vld [vmem:[%s3 + $0xac] sm:$0xf]
    %v1452 = vld [vmem:[%s3 + $0xb0] sm:$0xf]
    %v1453 = vld [vmem:[%s3 + $0xb4] sm:$0xf]
    %v1454 = vld [vmem:[%s3 + $0xb8] sm:$0xf]
    %v1455 = vld [vmem:[%s3 + $0xbc] sm:$0xf]
    %v1456 = vld [vmem:[%s4] sm:$0x1]
    %v1458 = vlaneseq
    %v1459 = vshrl.u32 %v1458, 7
    %v1460 = vsub.s32 0, %v1459
    %v1461 = vrot.slane %v1456, %v1460
    %v1511 = vunpack.c.l.b16 %v1408
    %v1512 = vunpack.c.l.b16 %v1409
    %v1513 = vunpack.c.l.b16 %v1410
    %v1514 = vunpack.c.l.b16 %v1411
    %v1515 = vunpack.c.l.b16 %v1412
    %v1516 = vunpack.c.l.b16 %v1413
    %v1517 = vunpack.c.l.b16 %v1414
    %v1518 = vunpack.c.l.b16 %v1415
    %v1519 = vunpack.c.l.b16 %v1416
    %v1520 = vunpack.c.l.b16 %v1417
    %v1521 = vunpack.c.l.b16 %v1418
    %v1522 = vunpack.c.l.b16 %v1419
    %v1523 = vunpack.c.l.b16 %v1420
    %v1524 = vunpack.c.l.b16 %v1421
    %v1525 = vunpack.c.l.b16 %v1422
    %v1526 = vunpack.c.l.b16 %v1423
    %v1527 = vunpack.c.l.b16 %v1424
    %v1528 = vunpack.c.l.b16 %v1425
    %v1529 = vunpack.c.l.b16 %v1426
    %v1530 = vunpack.c.l.b16 %v1427
    %v1531 = vunpack.c.l.b16 %v1428
    %v1532 = vunpack.c.l.b16 %v1429
    %v1533 = vunpack.c.l.b16 %v1430
    %v1534 = vunpack.c.l.b16 %v1431
    %v1535 = vunpack.c.l.b16 %v1432
    %v1536 = vunpack.c.l.b16 %v1433
    %v1537 = vunpack.c.l.b16 %v1434
    %v1538 = vunpack.c.l.b16 %v1435
    %v1539 = vunpack.c.l.b16 %v1436
    %v1540 = vunpack.c.l.b16 %v1437
    %v1541 = vunpack.c.l.b16 %v1438
    %v1542 = vunpack.c.l.b16 %v1439
    %v1543 = vunpack.c.l.b16 %v1440
    %v1544 = vunpack.c.l.b16 %v1441
    %v1545 = vunpack.c.l.b16 %v1442
    %v1546 = vunpack.c.l.b16 %v1443
    %v1547 = vunpack.c.l.b16 %v1444
    %v1548 = vunpack.c.l.b16 %v1445
    %v1549 = vunpack.c.l.b16 %v1446
    %v1550 = vunpack.c.l.b16 %v1447
    %v1551 = vunpack.c.l.b16 %v1448
    %v1552 = vunpack.c.l.b16 %v1449
    %v1553 = vunpack.c.l.b16 %v1450
    %v1554 = vunpack.c.l.b16 %v1451
    %v1555 = vunpack.c.l.b16 %v1452
    %v1556 = vunpack.c.l.b16 %v1453
    %v1557 = vunpack.c.l.b16 %v1454
    %v1558 = vunpack.c.l.b16 %v1455
    %v1559 = vpack.c.b16 %v1512, %v1511
    %v1560 = vpack.c.b16 %v1514, %v1513
    %v1561 = vpack.c.b16 %v1516, %v1515
    %v1562 = vpack.c.b16 %v1518, %v1517
    %v1563 = vpack.c.b16 %v1520, %v1519
    %v1564 = vpack.c.b16 %v1522, %v1521
    %v1565 = vpack.c.b16 %v1524, %v1523
    %v1566 = vpack.c.b16 %v1526, %v1525
    %v1567 = vpack.c.b16 %v1528, %v1527
    %v1568 = vpack.c.b16 %v1530, %v1529
    %v1569 = vpack.c.b16 %v1532, %v1531
    %v1570 = vpack.c.b16 %v1534, %v1533
    %v1571 = vpack.c.b16 %v1536, %v1535
    %v1572 = vpack.c.b16 %v1538, %v1537
    %v1573 = vpack.c.b16 %v1540, %v1539
    %v1574 = vpack.c.b16 %v1542, %v1541
    %v1575 = vpack.c.b16 %v1544, %v1543
    %v1576 = vpack.c.b16 %v1546, %v1545
    %v1577 = vpack.c.b16 %v1548, %v1547
    %v1578 = vpack.c.b16 %v1550, %v1549
    %v1579 = vpack.c.b16 %v1552, %v1551
    %v1580 = vpack.c.b16 %v1554, %v1553
    %v1581 = vpack.c.b16 %v1556, %v1555
    %v1582 = vpack.c.b16 %v1558, %v1557
    %1607 = vmatprep.subr.bf16.mxu0 0
    %1608 = vmatpush1.bf16.msra.mxu0 %v1559
    %1609 = vmatprep.subr.bf16.mxu0 0
    %1610 = vmatpush1.bf16.msra.mxu0 %v1560
    %1611 = vmatprep.subr.bf16.mxu0 0
    %1612 = vmatpush1.bf16.msra.mxu0 %v1561
    %1613 = vmatprep.subr.bf16.mxu0 0
    %1614 = vmatpush1.bf16.msra.mxu0 %v1562
    %1615 = vmatprep.subr.bf16.mxu0 0
    %1616 = vmatpush1.bf16.msra.mxu0 %v1563
    %1617 = vmatprep.subr.bf16.mxu0 0
    %1618 = vmatpush1.bf16.msra.mxu0 %v1564
    %1619 = vmatprep.subr.bf16.mxu0 0
    %1620 = vmatpush1.bf16.msra.mxu0 %v1565
    %1621 = vmatprep.subr.bf16.mxu0 0
    %1622 = vmatpush1.bf16.msra.mxu0 %v1566
    %1623 = vmatprep.subr.bf16.mxu0 0
    %1624 = vmatpush1.bf16.msra.mxu0 %v1567
    %1625 = vmatprep.subr.bf16.mxu0 0
    %1626 = vmatpush1.bf16.msra.mxu0 %v1568
    %1627 = vmatprep.subr.bf16.mxu0 0
    %1628 = vmatpush1.bf16.msra.mxu0 %v1569
    %1629 = vmatprep.subr.bf16.mxu0 0
    %1630 = vmatpush1.bf16.msra.mxu0 %v1570
    %1631 = vmatprep.subr.bf16.mxu0 0
    %1632 = vmatpush1.bf16.msra.mxu0 %v1571
    %1633 = vmatprep.subr.bf16.mxu0 0
    %1634 = vmatpush1.bf16.msra.mxu0 %v1572
    %1635 = vmatprep.subr.bf16.mxu0 0
    %1636 = vmatpush1.bf16.msra.mxu0 %v1573
    %1637 = vmatprep.subr.bf16.mxu0 0
    %1638 = vmatpush1.bf16.msra.mxu0 %v1574
    %1639 = vmatprep.mubr.bf16.mxu0 %v1406
    %1640 = vmatmul.mubr.bf16.gmra.mrb[0].mxu0 %v1405
    %v1641 = vpop.f32.mrb[0].mxu0
    %v1642 = vadd.f32 %v1461, %v1641
    %v1643 = vpop.f32.mrb[0].mxu0
    %v1644 = vpop.f32.mrb[0].mxu0
    %v1645 = vadd.f32 %v1461, %v1644
    %v1646 = vpop.f32.mrb[0].mxu0
    %1647 = vdwg.mxu0
    %1648 = vmatprep.subr.bf16.mxu0 0
    %1649 = vmatpush1.bf16.msra.mxu0 %v1575
    %1650 = vmatprep.subr.bf16.mxu0 0
    %1651 = vmatpush1.bf16.msra.mxu0 %v1576
    %1652 = vmatprep.subr.bf16.mxu0 0
    %1653 = vmatpush1.bf16.msra.mxu0 %v1577
    %1654 = vmatprep.subr.bf16.mxu0 0
    %1655 = vmatpush1.bf16.msra.mxu0 %v1578
    %1656 = vmatprep.subr.bf16.mxu0 0
    %1657 = vmatpush1.bf16.msra.mxu0 %v1579
    %1658 = vmatprep.subr.bf16.mxu0 0
    %1659 = vmatpush1.bf16.msra.mxu0 %v1580
    %1660 = vmatprep.subr.bf16.mxu0 0
    %1661 = vmatpush1.bf16.msra.mxu0 %v1581
    %1662 = vmatprep.subr.bf16.mxu0 0
    %1663 = vmatpush1.bf16.msra.mxu0 %v1582
    %1664 = vmatprep.subr.bf16.mxu0 0
    %1665 = vmatpush1.bf16.msra.mxu0 0
    %1666 = vmatprep.subr.bf16.mxu0 0
    %1667 = vmatpush1.bf16.msra.mxu0 0
    %1668 = vmatprep.subr.bf16.mxu0 0
    %1669 = vmatpush1.bf16.msra.mxu0 0
    %1670 = vmatprep.subr.bf16.mxu0 0
    %1671 = vmatpush1.bf16.msra.mxu0 0
    %1672 = vmatprep.subr.bf16.mxu0 0
    %1673 = vmatpush1.bf16.msra.mxu0 0
    %1674 = vmatprep.subr.bf16.mxu0 0
    %1675 = vmatpush1.bf16.msra.mxu0 0
    %1676 = vmatprep.subr.bf16.mxu0 0
    %1677 = vmatpush1.bf16.msra.mxu0 0
    %1678 = vmatprep.subr.bf16.mxu0 0
    %1679 = vmatpush1.bf16.msra.mxu0 0
    %1680 = vmatprep.mubr.bf16.mxu0 0
    %1681 = vmatmul.mubr.bf16.gmra.mrb[0].mxu0 %v1407
    %v1682 = vpop.f32.mrb[0].mxu0
    %v1683 = vadd.f32 %v1642, %v1682
    %v1684 = vpop.f32.mrb[0].mxu0
    %v1685 = vpop.f32.mrb[0].mxu0
    %v1686 = vadd.f32 %v1645, %v1685
    %v1687 = vpop.f32.mrb[0].mxu0
    %1688 = vdwg.mxu0
    %v1689 = vmax.f32 %v1683, 0.0
    %v1690 = vmax.f32 %v1686, 0.0
    %v1691 = vpack.c.bf16 %v1690, %v1689
    %v1692 = vld [vmem:[%s5] sm:$0xf]
    %v1693 = vld [vmem:[%s5 + $0x4] sm:$0xf]
    %v1694 = vld [vmem:[%s5 + $0x8] sm:$0xf]
    %v1695 = vld [vmem:[%s5 + $0xc] sm:$0xf]
    %v1696 = vld [vmem:[%s5 + $0x10] sm:$0xf]
    %v1697 = vld [vmem:[%s5 + $0x14] sm:$0xf]
    %v1698 = vld [vmem:[%s5 + $0x18] sm:$0xf]
    %v1699 = vld [vmem:[%s5 + $0x1c] sm:$0xf]
    %v1700 = vld [vmem:[%s5 + $0x20] sm:$0xf]
    %v1701 = vld [vmem:[%s5 + $0x24] sm:$0xf]
    %v1702 = vld [vmem:[%s5 + $0x28] sm:$0xf]
    %v1703 = vld [vmem:[%s5 + $0x2c] sm:$0xf]
    %v1704 = vld [vmem:[%s5 + $0x30] sm:$0xf]
    %v1705 = vld [vmem:[%s5 + $0x34] sm:$0xf]
    %v1706 = vld [vmem:[%s5 + $0x38] sm:$0xf]
    %v1707 = vld [vmem:[%s5 + $0x3c] sm:$0xf]
    %v1708 = vld [vmem:[%s6] sm:$0x1]
    %v1710 = vlaneseq
    %v1711 = vshrl.u32 %v1710, 7
    %v1712 = vsub.s32 0, %v1711
    %v1713 = vrot.slane %v1708, %v1712
    %v1731 = vunpack.c.l.b16 %v1692
    %v1732 = vunpack.c.l.b16 %v1693
    %v1733 = vunpack.c.l.b16 %v1694
    %v1734 = vunpack.c.l.b16 %v1695
    %v1735 = vunpack.c.l.b16 %v1696
    %v1736 = vunpack.c.l.b16 %v1697
    %v1737 = vunpack.c.l.b16 %v1698
    %v1738 = vunpack.c.l.b16 %v1699
    %v1739 = vunpack.c.l.b16 %v1700
    %v1740 = vunpack.c.l.b16 %v1701
    %v1741 = vunpack.c.l.b16 %v1702
    %v1742 = vunpack.c.l.b16 %v1703
    %v1743 = vunpack.c.l.b16 %v1704
    %v1744 = vunpack.c.l.b16 %v1705
    %v1745 = vunpack.c.l.b16 %v1706
    %v1746 = vunpack.c.l.b16 %v1707
    %v1747 = vpack.c.b16 %v1732, %v1731
    %v1748 = vpack.c.b16 %v1734, %v1733
    %v1749 = vpack.c.b16 %v1736, %v1735
    %v1750 = vpack.c.b16 %v1738, %v1737
    %v1751 = vpack.c.b16 %v1740, %v1739
    %v1752 = vpack.c.b16 %v1742, %v1741
    %v1753 = vpack.c.b16 %v1744, %v1743
    %v1754 = vpack.c.b16 %v1746, %v1745
    %1763 = vmatprep.subr.bf16.mxu0 0
    %1764 = vmatpush1.bf16.msra.mxu0 %v1747
    %1765 = vmatprep.subr.bf16.mxu0 0
    %1766 = vmatpush1.bf16.msra.mxu0 %v1748
    %1767 = vmatprep.subr.bf16.mxu0 0
    %1768 = vmatpush1.bf16.msra.mxu0 %v1749
    %1769 = vmatprep.subr.bf16.mxu0 0
    %1770 = vmatpush1.bf16.msra.mxu0 %v1750
    %1771 = vmatprep.subr.bf16.mxu0 0
    %1772 = vmatpush1.bf16.msra.mxu0 %v1751
    %1773 = vmatprep.subr.bf16.mxu0 0
    %1774 = vmatpush1.bf16.msra.mxu0 %v1752
    %1775 = vmatprep.subr.bf16.mxu0 0
    %1776 = vmatpush1.bf16.msra.mxu0 %v1753
    %1777 = vmatprep.subr.bf16.mxu0 0
    %1778 = vmatpush1.bf16.msra.mxu0 %v1754
    %1779 = vmatprep.subr.bf16.mxu0 0
    %1780 = vmatpush1.bf16.msra.mxu0 0
    %1781 = vmatprep.subr.bf16.mxu0 0
    %1782 = vmatpush1.bf16.msra.mxu0 0
    %1783 = vmatprep.subr.bf16.mxu0 0
    %1784 = vmatpush1.bf16.msra.mxu0 0
    %1785 = vmatprep.subr.bf16.mxu0 0
    %1786 = vmatpush1.bf16.msra.mxu0 0
    %1787 = vmatprep.subr.bf16.mxu0 0
    %1788 = vmatpush1.bf16.msra.mxu0 0
    %1789 = vmatprep.subr.bf16.mxu0 0
    %1790 = vmatpush1.bf16.msra.mxu0 0
    %1791 = vmatprep.subr.bf16.mxu0 0
    %1792 = vmatpush1.bf16.msra.mxu0 0
    %1793 = vmatprep.subr.bf16.mxu0 0
    %1794 = vmatpush1.bf16.msra.mxu0 0
    %1795 = vmatprep.mubr.bf16.mxu0 0
    %1796 = vmatmul.mubr.bf16.gmra.mrb[0].mxu0 %v1691
    %v1797 = vpop.f32.mrb[0].mxu0
    %v1798 = vadd.f32 %v1713, %v1797
    %v1799 = vpop.f32.mrb[0].mxu0
    %v1800 = vpop.f32.mrb[0].mxu0
    %v1801 = vadd.f32 %v1713, %v1800
    %v1802 = vpop.f32.mrb[0].mxu0
    %1803 = vdwg.mxu0
    %1804 = vmax.xlane.f32.xlu0 %v1798
    %v1805 = vpop.xlane.xlu0 %1804
    %1806 = vmax.xlane.f32.xlu0 %v1801
    %v1807 = vpop.xlane.xlu0 %1806
    %v1808 = vsub.f32 %v1798, %v1805
    %v1809 = vsub.f32 %v1801, %v1807
    %v1810 = vmul.f32 %v1808, 1.442695
    %v1811 = vpow.pop %v1810
    %v1812 = vmul.f32 %v1809, 1.442695
    %v1813 = vpow.pop %v1812
    %1814 = vadd.xlane.f32.xlu0 %v1811
    %v1815 = vpop.xlane.xlu0 %1814
    %1816 = vadd.xlane.f32.xlu0 %v1813
    %v1817 = vpop.xlane.xlu0 %1816
    %v1818 = vrcp.pop %v1815
    %v1819 = vrcp.pop %v1817
    %v1820 = vmul.f32 %v1811, %v1818
    %v1821 = vmul.f32 %v1813, %v1819
    %v1822 = vpack.c.bf16 %v1821, %v1820
    %v1824 = vunpack.c.l.b16 %v1822
    %v1825 = vunpack.c.h.b16 %v1822
    %v1826 = vpack.c.b16 %v1824, %v1824
    %v1827 = vpack.c.b16 %v1825, %v1825
    %1830 = vst [vmem:[%s7] sm:$0xf] %v1826
    %1831 = vst [vmem:[%s7 + $0x4] sm:$0xf] %v1827
    // Predicated region
    $region34: #{simple_feedforward.1} parent=1 // pred_check
      _
    $region35: #{simple_feedforward.1} parent=1 // pred_check_branch
      %1833 = sbr.rel (0) target = $region37
    $region36: #{simple_feedforward.1} parent=1 // pred_region
      _
    $region37: #{simple_feedforward.1} parent=1 // pred_fallthru
      _
    // Predicated region
    $region38: #{simple_feedforward.1} parent=1 // pred_check
      _
    $region39: #{simple_feedforward.1} parent=1 // pred_check_branch
      %1835 = sbr.rel (0) target = $region41
    $region40: #{simple_feedforward.1} parent=1 // pred_region
      _
    $region41: #{simple_feedforward.1} parent=1 // pred_fallthru
      _
    %1836 = vsyncpa [#allocation3], 1

</llo_original>
